<compile_context>
chip_gen: v7x
topology: tpu7x:2x2x1
jax: 0.10.0
libtpu: 0.0.40
codegen_flags: <defaults>
</compile_context>

<pallas_src>
import jax
import jax.numpy as jnp
from jax.experimental import pallas as pl
from jax.experimental.pallas import tpu as pltpu


def _wa_mlp_kernel(x_ref, w1_ref, b1_ref, w2_ref, b2_ref, w3t_ref, b3_ref,
                   o_ref):
    # fc1 + ReLU: bf16 MXU matmul, f32 accumulation.
    h1 = jnp.dot(x_ref[...], w1_ref[...], preferred_element_type=jnp.float32)
    h1 = jnp.maximum(h1 + b1_ref[...], 0.0)
    # fc2 + ReLU.
    h2 = jnp.dot(h1.astype(w2_ref.dtype), w2_ref[...],
                 preferred_element_type=jnp.float32)
    h2 = jnp.maximum(h2 + b2_ref[...], 0.0)
    # fc3 (gamma already folded into w3t in the wrapper; lane-padded to 128).
    o_ref[...] = jnp.dot(h2.astype(w3t_ref.dtype), w3t_ref[...],
                         preferred_element_type=jnp.float32) + b3_ref[...]


def weight_aligning_forward(x, params, *, num_old_classes, batch_tile=256):
    """x: (B, C, H, W) float32. params: w1 (in,hid), b1 (1,hid), w2 (hid,hid),
    b2 (1,hid), w3 (out,hid) [PyTorch fc3 layout], b3 (1,out)."""
    B = x.shape[0]
    xf = x.reshape(B, -1)                          # nn.Flatten()
    K = xf.shape[1]
    w1, b1 = params["w1"], params["b1"]
    w2, b2 = params["w2"], params["b2"]
    w3, b3 = params["w3"], params["b3"]
    hidden = w1.shape[1]
    out_size = w3.shape[0]

    # ---- wrapper-side layout / weight-aligning prep (static weights) ----
    # Fold gamma into the new-class rows of w3 (identical to the PyTorch
    # module, which rewrites fc3.weight in place). No eps guard, by design.
    if out_size != num_old_classes:
        norm_old = jnp.linalg.norm(w3[:num_old_classes], axis=1)
        norm_new = jnp.linalg.norm(w3[num_old_classes:], axis=1)
        gamma = jnp.mean(norm_old) / jnp.mean(norm_new)
        w3 = w3.at[num_old_classes:].set(gamma * w3[num_old_classes:])

    # Pad the contraction dim 784 -> 896 (zero pad, exact), cast to bf16.
    K_pad = ((K + 127) // 128) * 128
    xf = xf.astype(jnp.bfloat16)
    if K_pad != K:
        xf = jnp.pad(xf, ((0, 0), (0, K_pad - K)))
        w1 = jnp.pad(w1, ((0, K_pad - K), (0, 0)))
    w1 = w1.astype(jnp.bfloat16)
    w2 = w2.astype(jnp.bfloat16)

    # fc3: transpose to (hidden, out), lane-pad out -> 128, cast bf16.
    out_pad = max(128, ((out_size + 127) // 128) * 128)
    w3t = jnp.transpose(w3)                        # (hidden, out)
    if out_pad != out_size:
        w3t = jnp.pad(w3t, ((0, 0), (0, out_pad - out_size)))
        b3 = jnp.pad(b3, ((0, 0), (0, out_pad - out_size)))
    w3t = w3t.astype(jnp.bfloat16)

    # Batch padding / tiling ("parallel" axis; shards across TCs on v7x).
    if B > batch_tile:
        B_pad = ((B + batch_tile - 1) // batch_tile) * batch_tile
        bt = batch_tile
    else:
        B_pad = ((B + 7) // 8) * 8
        bt = B_pad
    if B_pad != B:
        xf = jnp.pad(xf, ((0, B_pad - B), (0, 0)))

    grid = (B_pad // bt,)

    out = pl.pallas_call(
        _wa_mlp_kernel,
        out_shape=jax.ShapeDtypeStruct((B_pad, out_pad), jnp.float32),
        grid_spec=pltpu.PrefetchScalarGridSpec(
            num_scalar_prefetch=0,
            grid=grid,
            in_specs=[
                pl.BlockSpec((bt, K_pad), lambda b: (b, 0)),        # x tile
                pl.BlockSpec((K_pad, hidden), lambda b: (0, 0)),    # w1 resident
                pl.BlockSpec((1, hidden), lambda b: (0, 0)),        # b1
                pl.BlockSpec((hidden, hidden), lambda b: (0, 0)),   # w2 resident
                pl.BlockSpec((1, hidden), lambda b: (0, 0)),        # b2
                pl.BlockSpec((hidden, out_pad), lambda b: (0, 0)),  # w3^T resident
                pl.BlockSpec((1, out_pad), lambda b: (0, 0)),       # b3
            ],
            out_specs=pl.BlockSpec((bt, out_pad), lambda b: (b, 0)),
        ),
        compiler_params=pltpu.CompilerParams(
            dimension_semantics=("parallel",)),
    )(xf, w1, b1, w2, b2, w3t, b3)
    return out[:B, :out_size]


def _init_params(key, input_size, hidden_size, output_size):
    """Deterministic init mimicking nn.Linear (uniform +/- 1/sqrt(fan_in))."""
    ks = jax.random.split(key, 6)

    def lin(kw, kb, fan_in, fan_out):
        bound = 1.0 / jnp.sqrt(fan_in)
        w = jax.random.uniform(kw, (fan_in, fan_out), jnp.float32, -bound, bound)
        b = jax.random.uniform(kb, (1, fan_out), jnp.float32, -bound, bound)
        return w, b

    w1, b1 = lin(ks[0], ks[1], input_size, hidden_size)
    w2, b2 = lin(ks[2], ks[3], hidden_size, hidden_size)
    bound3 = 1.0 / jnp.sqrt(hidden_size)
    # fc3 kept in PyTorch (out, in) layout; wrapper transposes for the matmul.
    w3 = jax.random.uniform(ks[4], (output_size, hidden_size), jnp.float32,
                            -bound3, bound3)
    b3 = jax.random.uniform(ks[5], (1, output_size), jnp.float32,
                            -bound3, bound3)
    return dict(w1=w1, b1=b1, w2=w2, b2=b2, w3=w3, b3=b3)


def _reference_forward(x, params, *, num_old_classes):
    """Pure-JAX reference with the same bf16-weight / f32-accumulate numerics
    as the kernel (validation is vs this bf16-matched reference)."""
    B = x.shape[0]
    xf = x.reshape(B, -1).astype(jnp.bfloat16)
    w1 = params["w1"].astype(jnp.bfloat16)
    w2 = params["w2"].astype(jnp.bfloat16)
    h1 = jax.nn.relu(
        jnp.dot(xf, w1, preferred_element_type=jnp.float32) + params["b1"])
    h2 = jax.nn.relu(
        jnp.dot(h1.astype(jnp.bfloat16), w2,
                preferred_element_type=jnp.float32) + params["b2"])
    w3 = params["w3"]
    out_size = w3.shape[0]
    if out_size != num_old_classes:
        norm_old = jnp.linalg.norm(w3[:num_old_classes], axis=1)
        norm_new = jnp.linalg.norm(w3[num_old_classes:], axis=1)
        gamma = jnp.mean(norm_old) / jnp.mean(norm_new)
        w3 = w3.at[num_old_classes:].set(gamma * w3[num_old_classes:])
    w3 = w3.astype(jnp.bfloat16)
    return jnp.dot(h2.astype(jnp.bfloat16), w3.T,
                   preferred_element_type=jnp.float32) + params["b3"]


if __name__ == "__main__":
    # Module-implied sizes: input 28*28, hidden 512. Use output_size=8 with
    # num_old_classes=5 so the weight-aligning branch is actually exercised.
    input_size = 28 * 28
    hidden_size = 512
    output_size = 8
    num_old_classes = 5
    batch = 8

    key = jax.random.PRNGKey(0)
    k_x, k_p = jax.random.split(key)
    x = jax.random.normal(k_x, (batch, 1, 28, 28), jnp.float32)
    params = _init_params(k_p, input_size, hidden_size, output_size)

    out = weight_aligning_forward(x, params, num_old_classes=num_old_classes)
    out = jax.block_until_ready(out)

    ref = _reference_forward(x, params, num_old_classes=num_old_classes)
    assert out.shape == (batch, output_size)
    assert jnp.allclose(out, ref, atol=1e-3, rtol=1e-3), "mismatch vs reference"

    print("KERNEL_OK")
</pallas_src>

<mosaic_0001>
module attributes {stable_mosaic.version = 11 : i64} {
  func.func @_wa_mlp_kernel(%arg0: i32, %arg1: memref<8x896xbf16, #tpu.memory_space<vmem>>, %arg2: memref<896x512xbf16, #tpu.memory_space<vmem>>, %arg3: memref<1x512xf32, #tpu.memory_space<vmem>>, %arg4: memref<512x512xbf16, #tpu.memory_space<vmem>>, %arg5: memref<1x512xf32, #tpu.memory_space<vmem>>, %arg6: memref<512x128xbf16, #tpu.memory_space<vmem>>, %arg7: memref<1x128xf32, #tpu.memory_space<vmem>>, %arg8: memref<8x128xf32, #tpu.memory_space<vmem>>) attributes {dimension_semantics = [#tpu.dimension_semantics<parallel>], iteration_bounds = array<i64: 1>, scalar_prefetch = 0 : i64, scratch_operands = 0 : i64, tpu.core_type = #tpu.core_type<tc>, window_params = [{transform_indices = @transform_0, window_bounds = array<i64: 8, 896>}, {pipeline_mode = #tpu.pipeline_mode<synchronous>, transform_indices = @transform_1, window_bounds = array<i64: 896, 512>}, {pipeline_mode = #tpu.pipeline_mode<synchronous>, transform_indices = @transform_2, window_bounds = array<i64: 1, 512>}, {pipeline_mode = #tpu.pipeline_mode<synchronous>, transform_indices = @transform_3, window_bounds = array<i64: 512, 512>}, {pipeline_mode = #tpu.pipeline_mode<synchronous>, transform_indices = @transform_4, window_bounds = array<i64: 1, 512>}, {pipeline_mode = #tpu.pipeline_mode<synchronous>, transform_indices = @transform_5, window_bounds = array<i64: 512, 128>}, {pipeline_mode = #tpu.pipeline_mode<synchronous>, transform_indices = @transform_6, window_bounds = array<i64: 1, 128>}, {transform_indices = @transform_7, window_bounds = array<i64: 8, 128>}]} {
    %c0 = arith.constant 0 : index
    %c0_0 = arith.constant 0 : index
    %0 = vector.load %arg1[%c0, %c0_0] : memref<8x896xbf16, #tpu.memory_space<vmem>>, vector<8x896xbf16>
    %c0_1 = arith.constant 0 : index
    %c0_2 = arith.constant 0 : index
    %1 = vector.load %arg2[%c0_1, %c0_2] : memref<896x512xbf16, #tpu.memory_space<vmem>>, vector<896x512xbf16>
    %cst = arith.constant dense<0.000000e+00> : vector<8x512xf32>
    %2 = tpu.matmul %0, %1, %cst {dimension_numbers = #tpu.dot_dimension_numbers<[1], [0], [0], [1], [0, 0, 1, 1], [], []>} : vector<8x896xbf16>, vector<896x512xbf16>, vector<8x512xf32> -> vector<8x512xf32>
    %c0_3 = arith.constant 0 : index
    %c0_4 = arith.constant 0 : index
    %3 = vector.load %arg3[%c0_3, %c0_4] : memref<1x512xf32, #tpu.memory_space<vmem>>, vector<1x512xf32>
    %4 = vector.broadcast %3 : vector<1x512xf32> to vector<8x512xf32>
    %5 = arith.addf %2, %4 : vector<8x512xf32>
    %cst_5 = arith.constant 0.000000e+00 : f32
    %6 = vector.broadcast %cst_5 : f32 to vector<8x512xf32>
    %7 = arith.maximumf %5, %6 : vector<8x512xf32>
    %8 = arith.truncf %7 : vector<8x512xf32> to vector<8x512xbf16>
    %c0_6 = arith.constant 0 : index
    %c0_7 = arith.constant 0 : index
    %9 = vector.load %arg4[%c0_6, %c0_7] : memref<512x512xbf16, #tpu.memory_space<vmem>>, vector<512x512xbf16>
    %cst_8 = arith.constant dense<0.000000e+00> : vector<8x512xf32>
    %10 = tpu.matmul %8, %9, %cst_8 {dimension_numbers = #tpu.dot_dimension_numbers<[1], [0], [0], [1], [0, 0, 1, 1], [], []>} : vector<8x512xbf16>, vector<512x512xbf16>, vector<8x512xf32> -> vector<8x512xf32>
    %c0_9 = arith.constant 0 : index
    %c0_10 = arith.constant 0 : index
    %11 = vector.load %arg5[%c0_9, %c0_10] : memref<1x512xf32, #tpu.memory_space<vmem>>, vector<1x512xf32>
    %12 = vector.broadcast %11 : vector<1x512xf32> to vector<8x512xf32>
    %13 = arith.addf %10, %12 : vector<8x512xf32>
    %cst_11 = arith.constant 0.000000e+00 : f32
    %14 = vector.broadcast %cst_11 : f32 to vector<8x512xf32>
    %15 = arith.maximumf %13, %14 : vector<8x512xf32>
    %16 = arith.truncf %15 : vector<8x512xf32> to vector<8x512xbf16>
    %c0_12 = arith.constant 0 : index
    %c0_13 = arith.constant 0 : index
    %17 = vector.load %arg6[%c0_12, %c0_13] : memref<512x128xbf16, #tpu.memory_space<vmem>>, vector<512x128xbf16>
    %cst_14 = arith.constant dense<0.000000e+00> : vector<8x128xf32>
    %18 = tpu.matmul %16, %17, %cst_14 {dimension_numbers = #tpu.dot_dimension_numbers<[1], [0], [0], [1], [0, 0, 1, 1], [], []>} : vector<8x512xbf16>, vector<512x128xbf16>, vector<8x128xf32> -> vector<8x128xf32>
    %c0_15 = arith.constant 0 : index
    %c0_16 = arith.constant 0 : index
    %19 = vector.load %arg7[%c0_15, %c0_16] : memref<1x128xf32, #tpu.memory_space<vmem>>, vector<1x128xf32>
    %20 = vector.broadcast %19 : vector<1x128xf32> to vector<8x128xf32>
    %21 = arith.addf %18, %20 : vector<8x128xf32>
    %c0_17 = arith.constant 0 : index
    %c0_18 = arith.constant 0 : index
    %22 = vector.load %arg8[%c0_17, %c0_18] : memref<8x128xf32, #tpu.memory_space<vmem>>, vector<8x128xf32>
    tpu.vector_store %arg8[%c0_17, %c0_18], %21 {strides = array<i32>} : memref<8x128xf32, #tpu.memory_space<vmem>>, vector<8x128xf32>,
    return
  }
  func.func @transform_0(%arg0: i32) -> (i32, i32) {
    %c0_i32 = arith.constant 0 : i32
    %c0_i32_0 = arith.constant 0 : i32
    return %arg0, %c0_i32 : i32, i32
  }
  func.func @transform_1(%arg0: i32) -> (i32, i32) {
    %c0_i32 = arith.constant 0 : i32
    %c0_i32_0 = arith.constant 0 : i32
    %c0_i32_1 = arith.constant 0 : i32
    return %c0_i32, %c0_i32_0 : i32, i32
  }
  func.func @transform_2(%arg0: i32) -> (i32, i32) {
    %c0_i32 = arith.constant 0 : i32
    %c0_i32_0 = arith.constant 0 : i32
    %c0_i32_1 = arith.constant 0 : i32
    return %c0_i32, %c0_i32_0 : i32, i32
  }
  func.func @transform_3(%arg0: i32) -> (i32, i32) {
    %c0_i32 = arith.constant 0 : i32
    %c0_i32_0 = arith.constant 0 : i32
    %c0_i32_1 = arith.constant 0 : i32
    return %c0_i32, %c0_i32_0 : i32, i32
  }
  func.func @transform_4(%arg0: i32) -> (i32, i32) {
    %c0_i32 = arith.constant 0 : i32
    %c0_i32_0 = arith.constant 0 : i32
    %c0_i32_1 = arith.constant 0 : i32
    return %c0_i32, %c0_i32_0 : i32, i32
  }
  func.func @transform_5(%arg0: i32) -> (i32, i32) {
    %c0_i32 = arith.constant 0 : i32
    %c0_i32_0 = arith.constant 0 : i32
    %c0_i32_1 = arith.constant 0 : i32
    return %c0_i32, %c0_i32_0 : i32, i32
  }
  func.func @transform_6(%arg0: i32) -> (i32, i32) {
    %c0_i32 = arith.constant 0 : i32
    %c0_i32_0 = arith.constant 0 : i32
    %c0_i32_1 = arith.constant 0 : i32
    return %c0_i32, %c0_i32_0 : i32, i32
  }
  func.func @transform_7(%arg0: i32) -> (i32, i32) {
    %c0_i32 = arith.constant 0 : i32
    %c0_i32_0 = arith.constant 0 : i32
    return %arg0, %c0_i32 : i32, i32
  }
}

</mosaic_0001>

<llo_original>
// kernel: tpu_custom_call.1
$region0: #{tpu_custom_call.1}
  #allocation0 [shape = 'u32[]', space=smem, size = 0x4, offset = 0x4, fixed_abs, tag = 'smem constant byte address 0x4 - core index']
  #allocation1 [shape = 'u32[144,128]{1,0:T(1,128)}', space=vmem, size = 0x12000, scoped, tag = 'internal scratch']
  %s0 = inlined_call_operand.hbm [shape: bf16[8,896], index: 0, kind: input, shape index: {}]
  %s1 = inlined_call_operand.hbm [shape: bf16[896,512], index: 1, kind: input, shape index: {}]
  %s2 = inlined_call_operand.vmem [shape: f32[1,512], index: 2, kind: input, shape index: {}]
  %s3 = inlined_call_operand.hbm [shape: bf16[512,512], index: 3, kind: input, shape index: {}]
  %s4 = inlined_call_operand.vmem [shape: f32[1,512], index: 4, kind: input, shape index: {}]
  %s5 = inlined_call_operand.hbm [shape: bf16[512,128], index: 5, kind: input, shape index: {}]
  %s6 = inlined_call_operand.vmem [shape: f32[1,128], index: 6, kind: input, shape index: {}]
  %s7 = inlined_call_operand.hbm [shape: f32[8,128], index: 7, kind: output, shape index: {}]
  %s8 = sld [smem:[#allocation0]]
  $region54: #{tpu_custom_call.1} parent=0
    _
  %s10 = ssub.s32 1, %s8
  %s11 = scalar_select 0, %s10, %s8
  $region1: #{tpu_custom_call.1} parent=0
    #allocation2 [shape = 'u8[14336]{0}', space=vmem, size = 0x3800, scoped, tag = 'input window, operand 0, single buffered']
    #allocation3 [shape = 's32[1]{0}', space=sflag, size = 0x4, scoped, tag = 'scoped memory for tpu_custom_call.1']
    #allocation4 [shape = 's32[1]{0}', space=sflag, size = 0x4, scoped, tag = 'scoped memory for tpu_custom_call.1']
    #allocation5 [shape = 'u8[917504]{0}', space=vmem, size = 0xe0000, scoped, tag = 'input window, operand 1, single buffered']
    #allocation6 [shape = 's32[1]{0}', space=sflag, size = 0x4, scoped, tag = 'scoped memory for tpu_custom_call.1']
    #allocation7 [shape = 'u8[524288]{0}', space=vmem, size = 0x80000, scoped, tag = 'input window, operand 3, single buffered']
    #allocation8 [shape = 'u8[131072]{0}', space=vmem, size = 0x20000, scoped, tag = 'input window, operand 5, single buffered']
    #allocation9 [shape = 's32[1]{0}', space=sflag, size = 0x4, scoped, tag = 'scoped memory for tpu_custom_call.1']
    #allocation10 [shape = 'u8[4096]{0}', space=vmem, size = 0x1000, scoped, tag = 'output window, operand 0, single buffered']
    %12 = vsyncpa [#allocation3], 0
    %13 = vsyncpa [#allocation6], 0
    %14 = vsyncpa [#allocation9], 0
    %15 = vsyncpa [#allocation4], 0
    // Predicated region
    $region2: #{tpu_custom_call.1} parent=1 // pred_check
      _
    $region3: #{tpu_custom_call.1} parent=1 // pred_check_branch
      %17 = sbr.rel (0) target = $region5
    $region4: #{tpu_custom_call.1} parent=1 // pred_region
      %s19 = ssub.s32 448, 448
      %20 = vsyncadd [#allocation3], %s19
      %s22 = sshll.u32 [#allocation2], 4
      %s23 = int_to_ptr.vmem [resolvable:$true] %s22
      %25 = dma.hbm_to_vmem [thread:$0]  %s0, 448, %s23, [#allocation3]
    $region5: #{tpu_custom_call.1} parent=1 // pred_fallthru
      _
    // Predicated region
    $region6: #{tpu_custom_call.1} parent=1 // pred_check
      _
    $region7: #{tpu_custom_call.1} parent=1 // pred_check_branch
      %27 = sbr.rel (0) target = $region9
    $region8: #{tpu_custom_call.1} parent=1 // pred_region
      %s29 = ssub.s32 28672, 28672
      %30 = vsyncadd [#allocation6], %s29
      %s31 = sshll.u32 [#allocation5], 4
      %s32 = int_to_ptr.vmem [resolvable:$true] %s31
      %37 = dma.hbm_to_vmem [thread:$0]  %s1, 28672, %s32, [#allocation6], 256, 256, 16
    $region9: #{tpu_custom_call.1} parent=1 // pred_fallthru
      _
    // Predicated region
    $region10: #{tpu_custom_call.1} parent=1 // pred_check
      _
    $region11: #{tpu_custom_call.1} parent=1 // pred_check_branch
      %39 = sbr.rel (0) target = $region13
    $region12: #{tpu_custom_call.1} parent=1 // pred_region
      _
    $region13: #{tpu_custom_call.1} parent=1 // pred_fallthru
      _
    // Predicated region
    $region14: #{tpu_custom_call.1} parent=1 // pred_check
      _
    $region15: #{tpu_custom_call.1} parent=1 // pred_check_branch
      %41 = sbr.rel (0) target = $region17
    $region16: #{tpu_custom_call.1} parent=1 // pred_region
      %s43 = ssub.s32 16384, 16384
      %44 = vsyncadd [#allocation6], %s43
      %s45 = sshll.u32 [#allocation7], 4
      %s46 = int_to_ptr.vmem [resolvable:$true] %s45
      %51 = dma.hbm_to_vmem [thread:$0]  %s3, 16384, %s46, [#allocation6], 256, 256, 16
    $region17: #{tpu_custom_call.1} parent=1 // pred_fallthru
      _
    // Predicated region
    $region18: #{tpu_custom_call.1} parent=1 // pred_check
      _
    $region19: #{tpu_custom_call.1} parent=1 // pred_check_branch
      %53 = sbr.rel (0) target = $region21
    $region20: #{tpu_custom_call.1} parent=1 // pred_region
      _
    $region21: #{tpu_custom_call.1} parent=1 // pred_fallthru
      _
    // Predicated region
    $region22: #{tpu_custom_call.1} parent=1 // pred_check
      _
    $region23: #{tpu_custom_call.1} parent=1 // pred_check_branch
      %55 = sbr.rel (0) target = $region25
    $region24: #{tpu_custom_call.1} parent=1 // pred_region
      %s57 = ssub.s32 4096, 4096
      %58 = vsyncadd [#allocation9], %s57
      %s59 = sshll.u32 [#allocation8], 4
      %s60 = int_to_ptr.vmem [resolvable:$true] %s59
      %65 = dma.hbm_to_vmem [thread:$0]  %s5, 4096, %s60, [#allocation9], 64, 64, 4
    $region25: #{tpu_custom_call.1} parent=1 // pred_fallthru
      _
    // Predicated region
    $region26: #{tpu_custom_call.1} parent=1 // pred_check
      _
    $region27: #{tpu_custom_call.1} parent=1 // pred_check_branch
      %67 = sbr.rel (0) target = $region29
    $region28: #{tpu_custom_call.1} parent=1 // pred_region
      _
    $region29: #{tpu_custom_call.1} parent=1 // pred_fallthru
      _
    // Predicated region
    $region30: #{tpu_custom_call.1} parent=1 // pred_check
      _
    $region31: #{tpu_custom_call.1} parent=1 // pred_check_branch
      %69 = sbr.rel (0) target = $region33
    $region32: #{tpu_custom_call.1} parent=1 // pred_region
      %70 = dma.done [#allocation3], 448
    $region33: #{tpu_custom_call.1} parent=1 // pred_fallthru
      _
    // Predicated region
    $region34: #{tpu_custom_call.1} parent=1 // pred_check
      _
    $region35: #{tpu_custom_call.1} parent=1 // pred_check_branch
      %72 = sbr.rel (0) target = $region37
    $region36: #{tpu_custom_call.1} parent=1 // pred_region
      %73 = dma.done [#allocation6], 28672
    $region37: #{tpu_custom_call.1} parent=1 // pred_fallthru
      _
    // Predicated region
    $region38: #{tpu_custom_call.1} parent=1 // pred_check
      _
    $region39: #{tpu_custom_call.1} parent=1 // pred_check_branch
      %75 = sbr.rel (0) target = $region41
    $region40: #{tpu_custom_call.1} parent=1 // pred_region
      %76 = dma.done [#allocation6], 16384
    $region41: #{tpu_custom_call.1} parent=1 // pred_fallthru
      _
    // Predicated region
    $region42: #{tpu_custom_call.1} parent=1 // pred_check
      _
    $region43: #{tpu_custom_call.1} parent=1 // pred_check_branch
      %78 = sbr.rel (0) target = $region45
    $region44: #{tpu_custom_call.1} parent=1 // pred_region
      %79 = dma.done [#allocation9], 4096
    $region45: #{tpu_custom_call.1} parent=1 // pred_fallthru
      _
    %v81 = vld [vmem:[#allocation2] sm:$0xff]
    %v82 = vld [vmem:[#allocation2 + $0x8] sm:$0xff]
    %v83 = vld [vmem:[#allocation2 + $0x10] sm:$0xff]
    %v84 = vld [vmem:[#allocation2 + $0x18] sm:$0xf]
    %v85 = vld [vmem:[#allocation5] sm:$0xff]
    %v86 = vld [vmem:[#allocation5 + $0x8] sm:$0xff]
    %v87 = vld [vmem:[#allocation5 + $0x10] sm:$0xff]
    %v88 = vld [vmem:[#allocation5 + $0x18] sm:$0xff]
    %v89 = vld [vmem:[#allocation5 + $0x20] sm:$0xff]
    %v90 = vld [vmem:[#allocation5 + $0x28] sm:$0xff]
    %v91 = vld [vmem:[#allocation5 + $0x30] sm:$0xff]
    %v92 = vld [vmem:[#allocation5 + $0x38] sm:$0xff]
    %v93 = vld [vmem:[#allocation5 + $0x40] sm:$0xff]
    %v94 = vld [vmem:[#allocation5 + $0x48] sm:$0xff]
    %v95 = vld [vmem:[#allocation5 + $0x50] sm:$0xff]
    %v96 = vld [vmem:[#allocation5 + $0x58] sm:$0xff]
    %v97 = vld [vmem:[#allocation5 + $0x60] sm:$0xff]
    %v98 = vld [vmem:[#allocation5 + $0x68] sm:$0xff]
    %v99 = vld [vmem:[#allocation5 + $0x70] sm:$0xff]
    %v100 = vld [vmem:[#allocation5 + $0x78] sm:$0xff]
    %v101 = vld [vmem:[#allocation5 + $0x80] sm:$0xff]
    %v102 = vld [vmem:[#allocation5 + $0x88] sm:$0xff]
    %v103 = vld [vmem:[#allocation5 + $0x90] sm:$0xff]
    %v104 = vld [vmem:[#allocation5 + $0x98] sm:$0xff]
    %v105 = vld [vmem:[#allocation5 + $0xa0] sm:$0xff]
    %v106 = vld [vmem:[#allocation5 + $0xa8] sm:$0xff]
    %v107 = vld [vmem:[#allocation5 + $0xb0] sm:$0xff]
    %v108 = vld [vmem:[#allocation5 + $0xb8] sm:$0xff]
    %v109 = vld [vmem:[#allocation5 + $0xc0] sm:$0xff]
    %v110 = vld [vmem:[#allocation5 + $0xc8] sm:$0xff]
    %v111 = vld [vmem:[#allocation5 + $0xd0] sm:$0xff]
    %v112 = vld [vmem:[#allocation5 + $0xd8] sm:$0xff]
    %v113 = vld [vmem:[#allocation5 + $0xe0] sm:$0xff]
    %v114 = vld [vmem:[#allocation5 + $0xe8] sm:$0xff]
    %v115 = vld [vmem:[#allocation5 + $0xf0] sm:$0xff]
    %v116 = vld [vmem:[#allocation5 + $0xf8] sm:$0xff]
    %v117 = vld [vmem:[#allocation5 + $0x100] sm:$0xff]
    %v118 = vld [vmem:[#allocation5 + $0x108] sm:$0xff]
    %v119 = vld [vmem:[#allocation5 + $0x110] sm:$0xff]
    %v120 = vld [vmem:[#allocation5 + $0x118] sm:$0xff]
    %v121 = vld [vmem:[#allocation5 + $0x120] sm:$0xff]
    %v122 = vld [vmem:[#allocation5 + $0x128] sm:$0xff]
    %v123 = vld [vmem:[#allocation5 + $0x130] sm:$0xff]
    %v124 = vld [vmem:[#allocation5 + $0x138] sm:$0xff]
    %v125 = vld [vmem:[#allocation5 + $0x140] sm:$0xff]
    %v126 = vld [vmem:[#allocation5 + $0x148] sm:$0xff]
    %v127 = vld [vmem:[#allocation5 + $0x150] sm:$0xff]
    %v128 = vld [vmem:[#allocation5 + $0x158] sm:$0xff]
    %v129 = vld [vmem:[#allocation5 + $0x160] sm:$0xff]
    %v130 = vld [vmem:[#allocation5 + $0x168] sm:$0xff]
    %v131 = vld [vmem:[#allocation5 + $0x170] sm:$0xff]
    %v132 = vld [vmem:[#allocation5 + $0x178] sm:$0xff]
    %v133 = vld [vmem:[#allocation5 + $0x180] sm:$0xff]
    %v134 = vld [vmem:[#allocation5 + $0x188] sm:$0xff]
    %v135 = vld [vmem:[#allocation5 + $0x190] sm:$0xff]
    %v136 = vld [vmem:[#allocation5 + $0x198] sm:$0xff]
    %v137 = vld [vmem:[#allocation5 + $0x1a0] sm:$0xff]
    %v138 = vld [vmem:[#allocation5 + $0x1a8] sm:$0xff]
    %v139 = vld [vmem:[#allocation5 + $0x1b0] sm:$0xff]
    %v140 = vld [vmem:[#allocation5 + $0x1b8] sm:$0xff]
    %v141 = vld [vmem:[#allocation5 + $0x1c0] sm:$0xff]
    %v142 = vld [vmem:[#allocation5 + $0x1c8] sm:$0xff]
    %v143 = vld [vmem:[#allocation5 + $0x1d0] sm:$0xff]
    %v144 = vld [vmem:[#allocation5 + $0x1d8] sm:$0xff]
    %v145 = vld [vmem:[#allocation5 + $0x1e0] sm:$0xff]
    %v146 = vld [vmem:[#allocation5 + $0x1e8] sm:$0xff]
    %v147 = vld [vmem:[#allocation5 + $0x1f0] sm:$0xff]
    %v148 = vld [vmem:[#allocation5 + $0x1f8] sm:$0xff]
    %v149 = vld [vmem:[#allocation5 + $0x200] sm:$0xff]
    %v150 = vld [vmem:[#allocation5 + $0x208] sm:$0xff]
    %v151 = vld [vmem:[#allocation5 + $0x210] sm:$0xff]
    %v152 = vld [vmem:[#allocation5 + $0x218] sm:$0xff]
    %v153 = vld [vmem:[#allocation5 + $0x220] sm:$0xff]
    %v154 = vld [vmem:[#allocation5 + $0x228] sm:$0xff]
    %v155 = vld [vmem:[#allocation5 + $0x230] sm:$0xff]
    %v156 = vld [vmem:[#allocation5 + $0x238] sm:$0xff]
    %v157 = vld [vmem:[#allocation5 + $0x240] sm:$0xff]
    %v158 = vld [vmem:[#allocation5 + $0x248] sm:$0xff]
    %v159 = vld [vmem:[#allocation5 + $0x250] sm:$0xff]
    %v160 = vld [vmem:[#allocation5 + $0x258] sm:$0xff]
    %v161 = vld [vmem:[#allocation5 + $0x260] sm:$0xff]
    %v162 = vld [vmem:[#allocation5 + $0x268] sm:$0xff]
    %v163 = vld [vmem:[#allocation5 + $0x270] sm:$0xff]
    %v164 = vld [vmem:[#allocation5 + $0x278] sm:$0xff]
    %v165 = vld [vmem:[#allocation5 + $0x280] sm:$0xff]
    %v166 = vld [vmem:[#allocation5 + $0x288] sm:$0xff]
    %v167 = vld [vmem:[#allocation5 + $0x290] sm:$0xff]
    %v168 = vld [vmem:[#allocation5 + $0x298] sm:$0xff]
    %v169 = vld [vmem:[#allocation5 + $0x2a0] sm:$0xff]
    %v170 = vld [vmem:[#allocation5 + $0x2a8] sm:$0xff]
    %v171 = vld [vmem:[#allocation5 + $0x2b0] sm:$0xff]
    %v172 = vld [vmem:[#allocation5 + $0x2b8] sm:$0xff]
    %v173 = vld [vmem:[#allocation5 + $0x2c0] sm:$0xff]
    %v174 = vld [vmem:[#allocation5 + $0x2c8] sm:$0xff]
    %v175 = vld [vmem:[#allocation5 + $0x2d0] sm:$0xff]
    %v176 = vld [vmem:[#allocation5 + $0x2d8] sm:$0xff]
    %v177 = vld [vmem:[#allocation5 + $0x2e0] sm:$0xff]
    %v178 = vld [vmem:[#allocation5 + $0x2e8] sm:$0xff]
    %v179 = vld [vmem:[#allocation5 + $0x2f0] sm:$0xff]
    %v180 = vld [vmem:[#allocation5 + $0x2f8] sm:$0xff]
    %v181 = vld [vmem:[#allocation5 + $0x300] sm:$0xff]
    %v182 = vld [vmem:[#allocation5 + $0x308] sm:$0xff]
    %v183 = vld [vmem:[#allocation5 + $0x310] sm:$0xff]
    %v184 = vld [vmem:[#allocation5 + $0x318] sm:$0xff]
    %v185 = vld [vmem:[#allocation5 + $0x320] sm:$0xff]
    %v186 = vld [vmem:[#allocation5 + $0x328] sm:$0xff]
    %v187 = vld [vmem:[#allocation5 + $0x330] sm:$0xff]
    %v188 = vld [vmem:[#allocation5 + $0x338] sm:$0xff]
    %v189 = vld [vmem:[#allocation5 + $0x340] sm:$0xff]
    %v190 = vld [vmem:[#allocation5 + $0x348] sm:$0xff]
    %v191 = vld [vmem:[#allocation5 + $0x350] sm:$0xff]
    %v192 = vld [vmem:[#allocation5 + $0x358] sm:$0xff]
    %v193 = vld [vmem:[#allocation5 + $0x360] sm:$0xff]
    %v194 = vld [vmem:[#allocation5 + $0x368] sm:$0xff]
    %v195 = vld [vmem:[#allocation5 + $0x370] sm:$0xff]
    %v196 = vld [vmem:[#allocation5 + $0x378] sm:$0xff]
    %v197 = vld [vmem:[#allocation5 + $0x380] sm:$0xff]
    %v198 = vld [vmem:[#allocation5 + $0x388] sm:$0xff]
    %v199 = vld [vmem:[#allocation5 + $0x390] sm:$0xff]
    %v200 = vld [vmem:[#allocation5 + $0x398] sm:$0xff]
    %v201 = vld [vmem:[#allocation5 + $0x3a0] sm:$0xff]
    %v202 = vld [vmem:[#allocation5 + $0x3a8] sm:$0xff]
    %v203 = vld [vmem:[#allocation5 + $0x3b0] sm:$0xff]
    %v204 = vld [vmem:[#allocation5 + $0x3b8] sm:$0xff]
    %v205 = vld [vmem:[#allocation5 + $0x3c0] sm:$0xff]
    %v206 = vld [vmem:[#allocation5 + $0x3c8] sm:$0xff]
    %v207 = vld [vmem:[#allocation5 + $0x3d0] sm:$0xff]
    %v208 = vld [vmem:[#allocation5 + $0x3d8] sm:$0xff]
    %v209 = vld [vmem:[#allocation5 + $0x3e0] sm:$0xff]
    %v210 = vld [vmem:[#allocation5 + $0x3e8] sm:$0xff]
    %v211 = vld [vmem:[#allocation5 + $0x3f0] sm:$0xff]
    %v212 = vld [vmem:[#allocation5 + $0x3f8] sm:$0xff]
    %v213 = vld [vmem:[#allocation5 + $0x400] sm:$0xff]
    %v214 = vld [vmem:[#allocation5 + $0x408] sm:$0xff]
    %v215 = vld [vmem:[#allocation5 + $0x410] sm:$0xff]
    %v216 = vld [vmem:[#allocation5 + $0x418] sm:$0xff]
    %v217 = vld [vmem:[#allocation5 + $0x420] sm:$0xff]
    %v218 = vld [vmem:[#allocation5 + $0x428] sm:$0xff]
    %v219 = vld [vmem:[#allocation5 + $0x430] sm:$0xff]
    %v220 = vld [vmem:[#allocation5 + $0x438] sm:$0xff]
    %v221 = vld [vmem:[#allocation5 + $0x440] sm:$0xff]
    %v222 = vld [vmem:[#allocation5 + $0x448] sm:$0xff]
    %v223 = vld [vmem:[#allocation5 + $0x450] sm:$0xff]
    %v224 = vld [vmem:[#allocation5 + $0x458] sm:$0xff]
    %v225 = vld [vmem:[#allocation5 + $0x460] sm:$0xff]
    %v226 = vld [vmem:[#allocation5 + $0x468] sm:$0xff]
    %v227 = vld [vmem:[#allocation5 + $0x470] sm:$0xff]
    %v228 = vld [vmem:[#allocation5 + $0x478] sm:$0xff]
    %v229 = vld [vmem:[#allocation5 + $0x480] sm:$0xff]
    %v230 = vld [vmem:[#allocation5 + $0x488] sm:$0xff]
    %v231 = vld [vmem:[#allocation5 + $0x490] sm:$0xff]
    %v232 = vld [vmem:[#allocation5 + $0x498] sm:$0xff]
    %v233 = vld [vmem:[#allocation5 + $0x4a0] sm:$0xff]
    %v234 = vld [vmem:[#allocation5 + $0x4a8] sm:$0xff]
    %v235 = vld [vmem:[#allocation5 + $0x4b0] sm:$0xff]
    %v236 = vld [vmem:[#allocation5 + $0x4b8] sm:$0xff]
    %v237 = vld [vmem:[#allocation5 + $0x4c0] sm:$0xff]
    %v238 = vld [vmem:[#allocation5 + $0x4c8] sm:$0xff]
    %v239 = vld [vmem:[#allocation5 + $0x4d0] sm:$0xff]
    %v240 = vld [vmem:[#allocation5 + $0x4d8] sm:$0xff]
    %v241 = vld [vmem:[#allocation5 + $0x4e0] sm:$0xff]
    %v242 = vld [vmem:[#allocation5 + $0x4e8] sm:$0xff]
    %v243 = vld [vmem:[#allocation5 + $0x4f0] sm:$0xff]
    %v244 = vld [vmem:[#allocation5 + $0x4f8] sm:$0xff]
    %v245 = vld [vmem:[#allocation5 + $0x500] sm:$0xff]
    %v246 = vld [vmem:[#allocation5 + $0x508] sm:$0xff]
    %v247 = vld [vmem:[#allocation5 + $0x510] sm:$0xff]
    %v248 = vld [vmem:[#allocation5 + $0x518] sm:$0xff]
    %v249 = vld [vmem:[#allocation5 + $0x520] sm:$0xff]
    %v250 = vld [vmem:[#allocation5 + $0x528] sm:$0xff]
    %v251 = vld [vmem:[#allocation5 + $0x530] sm:$0xff]
    %v252 = vld [vmem:[#allocation5 + $0x538] sm:$0xff]
    %v253 = vld [vmem:[#allocation5 + $0x540] sm:$0xff]
    %v254 = vld [vmem:[#allocation5 + $0x548] sm:$0xff]
    %v255 = vld [vmem:[#allocation5 + $0x550] sm:$0xff]
    %v256 = vld [vmem:[#allocation5 + $0x558] sm:$0xff]
    %v257 = vld [vmem:[#allocation5 + $0x560] sm:$0xff]
    %v258 = vld [vmem:[#allocation5 + $0x568] sm:$0xff]
    %v259 = vld [vmem:[#allocation5 + $0x570] sm:$0xff]
    %v260 = vld [vmem:[#allocation5 + $0x578] sm:$0xff]
    %v261 = vld [vmem:[#allocation5 + $0x580] sm:$0xff]
    %v262 = vld [vmem:[#allocation5 + $0x588] sm:$0xff]
    %v263 = vld [vmem:[#allocation5 + $0x590] sm:$0xff]
    %v264 = vld [vmem:[#allocation5 + $0x598] sm:$0xff]
    %v265 = vld [vmem:[#allocation5 + $0x5a0] sm:$0xff]
    %v266 = vld [vmem:[#allocation5 + $0x5a8] sm:$0xff]
    %v267 = vld [vmem:[#allocation5 + $0x5b0] sm:$0xff]
    %v268 = vld [vmem:[#allocation5 + $0x5b8] sm:$0xff]
    %v269 = vld [vmem:[#allocation5 + $0x5c0] sm:$0xff]
    %v270 = vld [vmem:[#allocation5 + $0x5c8] sm:$0xff]
    %v271 = vld [vmem:[#allocation5 + $0x5d0] sm:$0xff]
    %v272 = vld [vmem:[#allocation5 + $0x5d8] sm:$0xff]
    %v273 = vld [vmem:[#allocation5 + $0x5e0] sm:$0xff]
    %v274 = vld [vmem:[#allocation5 + $0x5e8] sm:$0xff]
    %v275 = vld [vmem:[#allocation5 + $0x5f0] sm:$0xff]
    %v276 = vld [vmem:[#allocation5 + $0x5f8] sm:$0xff]
    %v277 = vld [vmem:[#allocation5 + $0x600] sm:$0xff]
    %v278 = vld [vmem:[#allocation5 + $0x608] sm:$0xff]
    %v279 = vld [vmem:[#allocation5 + $0x610] sm:$0xff]
    %v280 = vld [vmem:[#allocation5 + $0x618] sm:$0xff]
    %v281 = vld [vmem:[#allocation5 + $0x620] sm:$0xff]
    %v282 = vld [vmem:[#allocation5 + $0x628] sm:$0xff]
    %v283 = vld [vmem:[#allocation5 + $0x630] sm:$0xff]
    %v284 = vld [vmem:[#allocation5 + $0x638] sm:$0xff]
    %v285 = vld [vmem:[#allocation5 + $0x640] sm:$0xff]
    %v286 = vld [vmem:[#allocation5 + $0x648] sm:$0xff]
    %v287 = vld [vmem:[#allocation5 + $0x650] sm:$0xff]
    %v288 = vld [vmem:[#allocation5 + $0x658] sm:$0xff]
    %v289 = vld [vmem:[#allocation5 + $0x660] sm:$0xff]
    %v290 = vld [vmem:[#allocation5 + $0x668] sm:$0xff]
    %v291 = vld [vmem:[#allocation5 + $0x670] sm:$0xff]
    %v292 = vld [vmem:[#allocation5 + $0x678] sm:$0xff]
    %v293 = vld [vmem:[#allocation5 + $0x680] sm:$0xff]
    %v294 = vld [vmem:[#allocation5 + $0x688] sm:$0xff]
    %v295 = vld [vmem:[#allocation5 + $0x690] sm:$0xff]
    %v296 = vld [vmem:[#allocation5 + $0x698] sm:$0xff]
    %v297 = vld [vmem:[#allocation5 + $0x6a0] sm:$0xff]
    %v298 = vld [vmem:[#allocation5 + $0x6a8] sm:$0xff]
    %v299 = vld [vmem:[#allocation5 + $0x6b0] sm:$0xff]
    %v300 = vld [vmem:[#allocation5 + $0x6b8] sm:$0xff]
    %v301 = vld [vmem:[#allocation5 + $0x6c0] sm:$0xff]
    %v302 = vld [vmem:[#allocation5 + $0x6c8] sm:$0xff]
    %v303 = vld [vmem:[#allocation5 + $0x6d0] sm:$0xff]
    %v304 = vld [vmem:[#allocation5 + $0x6d8] sm:$0xff]
    %v305 = vld [vmem:[#allocation5 + $0x6e0] sm:$0xff]
    %v306 = vld [vmem:[#allocation5 + $0x6e8] sm:$0xff]
    %v307 = vld [vmem:[#allocation5 + $0x6f0] sm:$0xff]
    %v308 = vld [vmem:[#allocation5 + $0x6f8] sm:$0xff]
    %v309 = vld [vmem:[%s2] sm:$0xf]
    %v311 = vlaneseq
    %v312 = vshrl.u32 %v311, 7
    %v313 = vsub.s32 0, %v312
    %v314 = vrot.slane %v309, %v313
    %v315 = vlaneseq
    %v316 = vshrl.u32 %v315, 7
    %v317 = vsub.s32 1, %v316
    %v318 = vrot.slane %v309, %v317
    %v319 = vlaneseq
    %v320 = vshrl.u32 %v319, 7
    %v321 = vsub.s32 2, %v320
    %v322 = vrot.slane %v309, %v321
    %v323 = vlaneseq
    %v324 = vshrl.u32 %v323, 7
    %v325 = vsub.s32 3, %v324
    %v326 = vrot.slane %v309, %v325
    %v335 = vunpack.c.l.b16 %v81
    %v336 = vunpack.c.h.b16 %v81
    %v337 = vunpack.c.l.b16 %v82
    %v338 = vunpack.c.h.b16 %v82
    %v339 = vunpack.c.l.b16 %v83
    %v340 = vunpack.c.h.b16 %v83
    %v341 = vunpack.c.l.b16 %v84
    %v342 = vpack.c.b16 %v335, %v335
    %v343 = vpack.c.b16 %v336, %v336
    %v344 = vpack.c.b16 %v337, %v337
    %v345 = vpack.c.b16 %v338, %v338
    %v346 = vpack.c.b16 %v339, %v339
    %v347 = vpack.c.b16 %v340, %v340
    %v348 = vpack.c.b16 %v341, %v341
    %v580 = vunpack.c.l.b16 %v85
    %v581 = vunpack.c.h.b16 %v85
    %v582 = vunpack.c.l.b16 %v86
    %v583 = vunpack.c.h.b16 %v86
    %v584 = vunpack.c.l.b16 %v87
    %v585 = vunpack.c.h.b16 %v87
    %v586 = vunpack.c.l.b16 %v88
    %v587 = vunpack.c.h.b16 %v88
    %v588 = vunpack.c.l.b16 %v89
    %v589 = vunpack.c.h.b16 %v89
    %v590 = vunpack.c.l.b16 %v90
    %v591 = vunpack.c.h.b16 %v90
    %v592 = vunpack.c.l.b16 %v91
    %v593 = vunpack.c.h.b16 %v91
    %v594 = vunpack.c.l.b16 %v92
    %v595 = vunpack.c.h.b16 %v92
    %v596 = vunpack.c.l.b16 %v93
    %v597 = vunpack.c.h.b16 %v93
    %v598 = vunpack.c.l.b16 %v94
    %v599 = vunpack.c.h.b16 %v94
    %v600 = vunpack.c.l.b16 %v95
    %v601 = vunpack.c.h.b16 %v95
    %v602 = vunpack.c.l.b16 %v96
    %v603 = vunpack.c.h.b16 %v96
    %v604 = vunpack.c.l.b16 %v97
    %v605 = vunpack.c.h.b16 %v97
    %v606 = vunpack.c.l.b16 %v98
    %v607 = vunpack.c.h.b16 %v98
    %v608 = vunpack.c.l.b16 %v99
    %v609 = vunpack.c.h.b16 %v99
    %v610 = vunpack.c.l.b16 %v100
    %v611 = vunpack.c.h.b16 %v100
    %v612 = vunpack.c.l.b16 %v101
    %v613 = vunpack.c.h.b16 %v101
    %v614 = vunpack.c.l.b16 %v102
    %v615 = vunpack.c.h.b16 %v102
    %v616 = vunpack.c.l.b16 %v103
    %v617 = vunpack.c.h.b16 %v103
    %v618 = vunpack.c.l.b16 %v104
    %v619 = vunpack.c.h.b16 %v104
    %v620 = vunpack.c.l.b16 %v105
    %v621 = vunpack.c.h.b16 %v105
    %v622 = vunpack.c.l.b16 %v106
    %v623 = vunpack.c.h.b16 %v106
    %v624 = vunpack.c.l.b16 %v107
    %v625 = vunpack.c.h.b16 %v107
    %v626 = vunpack.c.l.b16 %v108
    %v627 = vunpack.c.h.b16 %v108
    %v628 = vunpack.c.l.b16 %v109
    %v629 = vunpack.c.h.b16 %v109
    %v630 = vunpack.c.l.b16 %v110
    %v631 = vunpack.c.h.b16 %v110
    %v632 = vunpack.c.l.b16 %v111
    %v633 = vunpack.c.h.b16 %v111
    %v634 = vunpack.c.l.b16 %v112
    %v635 = vunpack.c.h.b16 %v112
    %v636 = vunpack.c.l.b16 %v113
    %v637 = vunpack.c.h.b16 %v113
    %v638 = vunpack.c.l.b16 %v114
    %v639 = vunpack.c.h.b16 %v114
    %v640 = vunpack.c.l.b16 %v115
    %v641 = vunpack.c.h.b16 %v115
    %v642 = vunpack.c.l.b16 %v116
    %v643 = vunpack.c.h.b16 %v116
    %v644 = vunpack.c.l.b16 %v117
    %v645 = vunpack.c.h.b16 %v117
    %v646 = vunpack.c.l.b16 %v118
    %v647 = vunpack.c.h.b16 %v118
    %v648 = vunpack.c.l.b16 %v119
    %v649 = vunpack.c.h.b16 %v119
    %v650 = vunpack.c.l.b16 %v120
    %v651 = vunpack.c.h.b16 %v120
    %v652 = vunpack.c.l.b16 %v121
    %v653 = vunpack.c.h.b16 %v121
    %v654 = vunpack.c.l.b16 %v122
    %v655 = vunpack.c.h.b16 %v122
    %v656 = vunpack.c.l.b16 %v123
    %v657 = vunpack.c.h.b16 %v123
    %v658 = vunpack.c.l.b16 %v124
    %v659 = vunpack.c.h.b16 %v124
    %v660 = vunpack.c.l.b16 %v125
    %v661 = vunpack.c.h.b16 %v125
    %v662 = vunpack.c.l.b16 %v126
    %v663 = vunpack.c.h.b16 %v126
    %v664 = vunpack.c.l.b16 %v127
    %v665 = vunpack.c.h.b16 %v127
    %v666 = vunpack.c.l.b16 %v128
    %v667 = vunpack.c.h.b16 %v128
    %v668 = vunpack.c.l.b16 %v129
    %v669 = vunpack.c.h.b16 %v129
    %v670 = vunpack.c.l.b16 %v130
    %v671 = vunpack.c.h.b16 %v130
    %v672 = vunpack.c.l.b16 %v131
    %v673 = vunpack.c.h.b16 %v131
    %v674 = vunpack.c.l.b16 %v132
    %v675 = vunpack.c.h.b16 %v132
    %v676 = vunpack.c.l.b16 %v133
    %v677 = vunpack.c.h.b16 %v133
    %v678 = vunpack.c.l.b16 %v134
    %v679 = vunpack.c.h.b16 %v134
    %v680 = vunpack.c.l.b16 %v135
    %v681 = vunpack.c.h.b16 %v135
    %v682 = vunpack.c.l.b16 %v136
    %v683 = vunpack.c.h.b16 %v136
    %v684 = vunpack.c.l.b16 %v137
    %v685 = vunpack.c.h.b16 %v137
    %v686 = vunpack.c.l.b16 %v138
    %v687 = vunpack.c.h.b16 %v138
    %v688 = vunpack.c.l.b16 %v139
    %v689 = vunpack.c.h.b16 %v139
    %v690 = vunpack.c.l.b16 %v140
    %v691 = vunpack.c.h.b16 %v140
    %v692 = vunpack.c.l.b16 %v141
    %v693 = vunpack.c.h.b16 %v141
    %v694 = vunpack.c.l.b16 %v142
    %v695 = vunpack.c.h.b16 %v142
    %v696 = vunpack.c.l.b16 %v143
    %v697 = vunpack.c.h.b16 %v143
    %v698 = vunpack.c.l.b16 %v144
    %v699 = vunpack.c.h.b16 %v144
    %v700 = vunpack.c.l.b16 %v145
    %v701 = vunpack.c.h.b16 %v145
    %v702 = vunpack.c.l.b16 %v146
    %v703 = vunpack.c.h.b16 %v146
    %v704 = vunpack.c.l.b16 %v147
    %v705 = vunpack.c.h.b16 %v147
    %v706 = vunpack.c.l.b16 %v148
    %v707 = vunpack.c.h.b16 %v148
    %v708 = vunpack.c.l.b16 %v149
    %v709 = vunpack.c.h.b16 %v149
    %v710 = vunpack.c.l.b16 %v150
    %v711 = vunpack.c.h.b16 %v150
    %v712 = vunpack.c.l.b16 %v151
    %v713 = vunpack.c.h.b16 %v151
    %v714 = vunpack.c.l.b16 %v152
    %v715 = vunpack.c.h.b16 %v152
    %v716 = vunpack.c.l.b16 %v153
    %v717 = vunpack.c.h.b16 %v153
    %v718 = vunpack.c.l.b16 %v154
    %v719 = vunpack.c.h.b16 %v154
    %v720 = vunpack.c.l.b16 %v155
    %v721 = vunpack.c.h.b16 %v155
    %v722 = vunpack.c.l.b16 %v156
    %v723 = vunpack.c.h.b16 %v156
    %v724 = vunpack.c.l.b16 %v157
    %v725 = vunpack.c.h.b16 %v157
    %v726 = vunpack.c.l.b16 %v158
    %v727 = vunpack.c.h.b16 %v158
    %v728 = vunpack.c.l.b16 %v159
    %v729 = vunpack.c.h.b16 %v159
    %v730 = vunpack.c.l.b16 %v160
    %v731 = vunpack.c.h.b16 %v160
    %v732 = vunpack.c.l.b16 %v161
    %v733 = vunpack.c.h.b16 %v161
    %v734 = vunpack.c.l.b16 %v162
    %v735 = vunpack.c.h.b16 %v162
    %v736 = vunpack.c.l.b16 %v163
    %v737 = vunpack.c.h.b16 %v163
    %v738 = vunpack.c.l.b16 %v164
    %v739 = vunpack.c.h.b16 %v164
    %v740 = vunpack.c.l.b16 %v165
    %v741 = vunpack.c.h.b16 %v165
    %v742 = vunpack.c.l.b16 %v166
    %v743 = vunpack.c.h.b16 %v166
    %v744 = vunpack.c.l.b16 %v167
    %v745 = vunpack.c.h.b16 %v167
    %v746 = vunpack.c.l.b16 %v168
    %v747 = vunpack.c.h.b16 %v168
    %v748 = vunpack.c.l.b16 %v169
    %v749 = vunpack.c.h.b16 %v169
    %v750 = vunpack.c.l.b16 %v170
    %v751 = vunpack.c.h.b16 %v170
    %v752 = vunpack.c.l.b16 %v171
    %v753 = vunpack.c.h.b16 %v171
    %v754 = vunpack.c.l.b16 %v172
    %v755 = vunpack.c.h.b16 %v172
    %v756 = vunpack.c.l.b16 %v173
    %v757 = vunpack.c.h.b16 %v173
    %v758 = vunpack.c.l.b16 %v174
    %v759 = vunpack.c.h.b16 %v174
    %v760 = vunpack.c.l.b16 %v175
    %v761 = vunpack.c.h.b16 %v175
    %v762 = vunpack.c.l.b16 %v176
    %v763 = vunpack.c.h.b16 %v176
    %v764 = vunpack.c.l.b16 %v177
    %v765 = vunpack.c.h.b16 %v177
    %v766 = vunpack.c.l.b16 %v178
    %v767 = vunpack.c.h.b16 %v178
    %v768 = vunpack.c.l.b16 %v179
    %v769 = vunpack.c.h.b16 %v179
    %v770 = vunpack.c.l.b16 %v180
    %v771 = vunpack.c.h.b16 %v180
    %v772 = vunpack.c.l.b16 %v181
    %v773 = vunpack.c.h.b16 %v181
    %v774 = vunpack.c.l.b16 %v182
    %v775 = vunpack.c.h.b16 %v182
    %v776 = vunpack.c.l.b16 %v183
    %v777 = vunpack.c.h.b16 %v183
    %v778 = vunpack.c.l.b16 %v184
    %v779 = vunpack.c.h.b16 %v184
    %v780 = vunpack.c.l.b16 %v185
    %v781 = vunpack.c.h.b16 %v185
    %v782 = vunpack.c.l.b16 %v186
    %v783 = vunpack.c.h.b16 %v186
    %v784 = vunpack.c.l.b16 %v187
    %v785 = vunpack.c.h.b16 %v187
    %v786 = vunpack.c.l.b16 %v188
    %v787 = vunpack.c.h.b16 %v188
    %v788 = vunpack.c.l.b16 %v189
    %v789 = vunpack.c.h.b16 %v189
    %v790 = vunpack.c.l.b16 %v190
    %v791 = vunpack.c.h.b16 %v190
    %v792 = vunpack.c.l.b16 %v191
    %v793 = vunpack.c.h.b16 %v191
    %v794 = vunpack.c.l.b16 %v192
    %v795 = vunpack.c.h.b16 %v192
    %v796 = vunpack.c.l.b16 %v193
    %v797 = vunpack.c.h.b16 %v193
    %v798 = vunpack.c.l.b16 %v194
    %v799 = vunpack.c.h.b16 %v194
    %v800 = vunpack.c.l.b16 %v195
    %v801 = vunpack.c.h.b16 %v195
    %v802 = vunpack.c.l.b16 %v196
    %v803 = vunpack.c.h.b16 %v196
    %v804 = vunpack.c.l.b16 %v197
    %v805 = vunpack.c.h.b16 %v197
    %v806 = vunpack.c.l.b16 %v198
    %v807 = vunpack.c.h.b16 %v198
    %v808 = vunpack.c.l.b16 %v199
    %v809 = vunpack.c.h.b16 %v199
    %v810 = vunpack.c.l.b16 %v200
    %v811 = vunpack.c.h.b16 %v200
    %v812 = vunpack.c.l.b16 %v201
    %v813 = vunpack.c.h.b16 %v201
    %v814 = vunpack.c.l.b16 %v202
    %v815 = vunpack.c.h.b16 %v202
    %v816 = vunpack.c.l.b16 %v203
    %v817 = vunpack.c.h.b16 %v203
    %v818 = vunpack.c.l.b16 %v204
    %v819 = vunpack.c.h.b16 %v204
    %v820 = vunpack.c.l.b16 %v205
    %v821 = vunpack.c.h.b16 %v205
    %v822 = vunpack.c.l.b16 %v206
    %v823 = vunpack.c.h.b16 %v206
    %v824 = vunpack.c.l.b16 %v207
    %v825 = vunpack.c.h.b16 %v207
    %v826 = vunpack.c.l.b16 %v208
    %v827 = vunpack.c.h.b16 %v208
    %v828 = vunpack.c.l.b16 %v209
    %v829 = vunpack.c.h.b16 %v209
    %v830 = vunpack.c.l.b16 %v210
    %v831 = vunpack.c.h.b16 %v210
    %v832 = vunpack.c.l.b16 %v211
    %v833 = vunpack.c.h.b16 %v211
    %v834 = vunpack.c.l.b16 %v212
    %v835 = vunpack.c.h.b16 %v212
    %v836 = vunpack.c.l.b16 %v213
    %v837 = vunpack.c.h.b16 %v213
    %v838 = vunpack.c.l.b16 %v214
    %v839 = vunpack.c.h.b16 %v214
    %v840 = vunpack.c.l.b16 %v215
    %v841 = vunpack.c.h.b16 %v215
    %v842 = vunpack.c.l.b16 %v216
    %v843 = vunpack.c.h.b16 %v216
    %v844 = vunpack.c.l.b16 %v217
    %v845 = vunpack.c.h.b16 %v217
    %v846 = vunpack.c.l.b16 %v218
    %v847 = vunpack.c.h.b16 %v218
    %v848 = vunpack.c.l.b16 %v219
    %v849 = vunpack.c.h.b16 %v219
    %v850 = vunpack.c.l.b16 %v220
    %v851 = vunpack.c.h.b16 %v220
    %v852 = vunpack.c.l.b16 %v221
    %v853 = vunpack.c.h.b16 %v221
    %v854 = vunpack.c.l.b16 %v222
    %v855 = vunpack.c.h.b16 %v222
    %v856 = vunpack.c.l.b16 %v223
    %v857 = vunpack.c.h.b16 %v223
    %v858 = vunpack.c.l.b16 %v224
    %v859 = vunpack.c.h.b16 %v224
    %v860 = vunpack.c.l.b16 %v225
    %v861 = vunpack.c.h.b16 %v225
    %v862 = vunpack.c.l.b16 %v226
    %v863 = vunpack.c.h.b16 %v226
    %v864 = vunpack.c.l.b16 %v227
    %v865 = vunpack.c.h.b16 %v227
    %v866 = vunpack.c.l.b16 %v228
    %v867 = vunpack.c.h.b16 %v228
    %v868 = vunpack.c.l.b16 %v229
    %v869 = vunpack.c.h.b16 %v229
    %v870 = vunpack.c.l.b16 %v230
    %v871 = vunpack.c.h.b16 %v230
    %v872 = vunpack.c.l.b16 %v231
    %v873 = vunpack.c.h.b16 %v231
    %v874 = vunpack.c.l.b16 %v232
    %v875 = vunpack.c.h.b16 %v232
    %v876 = vunpack.c.l.b16 %v233
    %v877 = vunpack.c.h.b16 %v233
    %v878 = vunpack.c.l.b16 %v234
    %v879 = vunpack.c.h.b16 %v234
    %v880 = vunpack.c.l.b16 %v235
    %v881 = vunpack.c.h.b16 %v235
    %v882 = vunpack.c.l.b16 %v236
    %v883 = vunpack.c.h.b16 %v236
    %v884 = vunpack.c.l.b16 %v237
    %v885 = vunpack.c.h.b16 %v237
    %v886 = vunpack.c.l.b16 %v238
    %v887 = vunpack.c.h.b16 %v238
    %v888 = vunpack.c.l.b16 %v239
    %v889 = vunpack.c.h.b16 %v239
    %v890 = vunpack.c.l.b16 %v240
    %v891 = vunpack.c.h.b16 %v240
    %v892 = vunpack.c.l.b16 %v241
    %v893 = vunpack.c.h.b16 %v241
    %v894 = vunpack.c.l.b16 %v242
    %v895 = vunpack.c.h.b16 %v242
    %v896 = vunpack.c.l.b16 %v243
    %v897 = vunpack.c.h.b16 %v243
    %v898 = vunpack.c.l.b16 %v244
    %v899 = vunpack.c.h.b16 %v244
    %v900 = vunpack.c.l.b16 %v245
    %v901 = vunpack.c.h.b16 %v245
    %v902 = vunpack.c.l.b16 %v246
    %v903 = vunpack.c.h.b16 %v246
    %v904 = vunpack.c.l.b16 %v247
    %v905 = vunpack.c.h.b16 %v247
    %v906 = vunpack.c.l.b16 %v248
    %v907 = vunpack.c.h.b16 %v248
    %v908 = vunpack.c.l.b16 %v249
    %v909 = vunpack.c.h.b16 %v249
    %v910 = vunpack.c.l.b16 %v250
    %v911 = vunpack.c.h.b16 %v250
    %v912 = vunpack.c.l.b16 %v251
    %v913 = vunpack.c.h.b16 %v251
    %v914 = vunpack.c.l.b16 %v252
    %v915 = vunpack.c.h.b16 %v252
    %v916 = vunpack.c.l.b16 %v253
    %v917 = vunpack.c.h.b16 %v253
    %v918 = vunpack.c.l.b16 %v254
    %v919 = vunpack.c.h.b16 %v254
    %v920 = vunpack.c.l.b16 %v255
    %v921 = vunpack.c.h.b16 %v255
    %v922 = vunpack.c.l.b16 %v256
    %v923 = vunpack.c.h.b16 %v256
    %v924 = vunpack.c.l.b16 %v257
    %v925 = vunpack.c.h.b16 %v257
    %v926 = vunpack.c.l.b16 %v258
    %v927 = vunpack.c.h.b16 %v258
    %v928 = vunpack.c.l.b16 %v259
    %v929 = vunpack.c.h.b16 %v259
    %v930 = vunpack.c.l.b16 %v260
    %v931 = vunpack.c.h.b16 %v260
    %v932 = vunpack.c.l.b16 %v261
    %v933 = vunpack.c.h.b16 %v261
    %v934 = vunpack.c.l.b16 %v262
    %v935 = vunpack.c.h.b16 %v262
    %v936 = vunpack.c.l.b16 %v263
    %v937 = vunpack.c.h.b16 %v263
    %v938 = vunpack.c.l.b16 %v264
    %v939 = vunpack.c.h.b16 %v264
    %v940 = vunpack.c.l.b16 %v265
    %v941 = vunpack.c.h.b16 %v265
    %v942 = vunpack.c.l.b16 %v266
    %v943 = vunpack.c.h.b16 %v266
    %v944 = vunpack.c.l.b16 %v267
    %v945 = vunpack.c.h.b16 %v267
    %v946 = vunpack.c.l.b16 %v268
    %v947 = vunpack.c.h.b16 %v268
    %v948 = vunpack.c.l.b16 %v269
    %v949 = vunpack.c.h.b16 %v269
    %v950 = vunpack.c.l.b16 %v270
    %v951 = vunpack.c.h.b16 %v270
    %v952 = vunpack.c.l.b16 %v271
    %v953 = vunpack.c.h.b16 %v271
    %v954 = vunpack.c.l.b16 %v272
    %v955 = vunpack.c.h.b16 %v272
    %v956 = vunpack.c.l.b16 %v273
    %v957 = vunpack.c.h.b16 %v273
    %v958 = vunpack.c.l.b16 %v274
    %v959 = vunpack.c.h.b16 %v274
    %v960 = vunpack.c.l.b16 %v275
    %v961 = vunpack.c.h.b16 %v275
    %v962 = vunpack.c.l.b16 %v276
    %v963 = vunpack.c.h.b16 %v276
    %v964 = vunpack.c.l.b16 %v277
    %v965 = vunpack.c.h.b16 %v277
    %v966 = vunpack.c.l.b16 %v278
    %v967 = vunpack.c.h.b16 %v278
    %v968 = vunpack.c.l.b16 %v279
    %v969 = vunpack.c.h.b16 %v279
    %v970 = vunpack.c.l.b16 %v280
    %v971 = vunpack.c.h.b16 %v280
    %v972 = vunpack.c.l.b16 %v281
    %v973 = vunpack.c.h.b16 %v281
    %v974 = vunpack.c.l.b16 %v282
    %v975 = vunpack.c.h.b16 %v282
    %v976 = vunpack.c.l.b16 %v283
    %v977 = vunpack.c.h.b16 %v283
    %v978 = vunpack.c.l.b16 %v284
    %v979 = vunpack.c.h.b16 %v284
    %v980 = vunpack.c.l.b16 %v285
    %v981 = vunpack.c.h.b16 %v285
    %v982 = vunpack.c.l.b16 %v286
    %v983 = vunpack.c.h.b16 %v286
    %v984 = vunpack.c.l.b16 %v287
    %v985 = vunpack.c.h.b16 %v287
    %v986 = vunpack.c.l.b16 %v288
    %v987 = vunpack.c.h.b16 %v288
    %v988 = vunpack.c.l.b16 %v289
    %v989 = vunpack.c.h.b16 %v289
    %v990 = vunpack.c.l.b16 %v290
    %v991 = vunpack.c.h.b16 %v290
    %v992 = vunpack.c.l.b16 %v291
    %v993 = vunpack.c.h.b16 %v291
    %v994 = vunpack.c.l.b16 %v292
    %v995 = vunpack.c.h.b16 %v292
    %v996 = vunpack.c.l.b16 %v293
    %v997 = vunpack.c.h.b16 %v293
    %v998 = vunpack.c.l.b16 %v294
    %v999 = vunpack.c.h.b16 %v294
    %v1000 = vunpack.c.l.b16 %v295
    %v1001 = vunpack.c.h.b16 %v295
    %v1002 = vunpack.c.l.b16 %v296
    %v1003 = vunpack.c.h.b16 %v296
    %v1004 = vunpack.c.l.b16 %v297
    %v1005 = vunpack.c.h.b16 %v297
    %v1006 = vunpack.c.l.b16 %v298
    %v1007 = vunpack.c.h.b16 %v298
    %v1008 = vunpack.c.l.b16 %v299
    %v1009 = vunpack.c.h.b16 %v299
    %v1010 = vunpack.c.l.b16 %v300
    %v1011 = vunpack.c.h.b16 %v300
    %v1012 = vunpack.c.l.b16 %v301
    %v1013 = vunpack.c.h.b16 %v301
    %v1014 = vunpack.c.l.b16 %v302
    %v1015 = vunpack.c.h.b16 %v302
    %v1016 = vunpack.c.l.b16 %v303
    %v1017 = vunpack.c.h.b16 %v303
    %v1018 = vunpack.c.l.b16 %v304
    %v1019 = vunpack.c.h.b16 %v304
    %v1020 = vunpack.c.l.b16 %v305
    %v1021 = vunpack.c.h.b16 %v305
    %v1022 = vunpack.c.l.b16 %v306
    %v1023 = vunpack.c.h.b16 %v306
    %v1024 = vunpack.c.l.b16 %v307
    %v1025 = vunpack.c.h.b16 %v307
    %v1026 = vunpack.c.l.b16 %v308
    %v1027 = vunpack.c.h.b16 %v308
    %v1028 = vpack.c.b16 %v584, %v580
    %v1029 = vpack.c.b16 %v585, %v581
    %v1030 = vpack.c.b16 %v586, %v582
    %v1031 = vpack.c.b16 %v587, %v583
    %v1032 = vpack.c.b16 %v592, %v588
    %v1033 = vpack.c.b16 %v593, %v589
    %v1034 = vpack.c.b16 %v594, %v590
    %v1035 = vpack.c.b16 %v595, %v591
    %v1036 = vpack.c.b16 %v600, %v596
    %v1037 = vpack.c.b16 %v601, %v597
    %v1038 = vpack.c.b16 %v602, %v598
    %v1039 = vpack.c.b16 %v603, %v599
    %v1040 = vpack.c.b16 %v608, %v604
    %v1041 = vpack.c.b16 %v609, %v605
    %v1042 = vpack.c.b16 %v610, %v606
    %v1043 = vpack.c.b16 %v611, %v607
    %v1044 = vpack.c.b16 %v616, %v612
    %v1045 = vpack.c.b16 %v617, %v613
    %v1046 = vpack.c.b16 %v618, %v614
    %v1047 = vpack.c.b16 %v619, %v615
    %v1048 = vpack.c.b16 %v624, %v620
    %v1049 = vpack.c.b16 %v625, %v621
    %v1050 = vpack.c.b16 %v626, %v622
    %v1051 = vpack.c.b16 %v627, %v623
    %v1052 = vpack.c.b16 %v632, %v628
    %v1053 = vpack.c.b16 %v633, %v629
    %v1054 = vpack.c.b16 %v634, %v630
    %v1055 = vpack.c.b16 %v635, %v631
    %v1056 = vpack.c.b16 %v640, %v636
    %v1057 = vpack.c.b16 %v641, %v637
    %v1058 = vpack.c.b16 %v642, %v638
    %v1059 = vpack.c.b16 %v643, %v639
    %v1060 = vpack.c.b16 %v648, %v644
    %v1061 = vpack.c.b16 %v649, %v645
    %v1062 = vpack.c.b16 %v650, %v646
    %v1063 = vpack.c.b16 %v651, %v647
    %v1064 = vpack.c.b16 %v656, %v652
    %v1065 = vpack.c.b16 %v657, %v653
    %v1066 = vpack.c.b16 %v658, %v654
    %v1067 = vpack.c.b16 %v659, %v655
    %v1068 = vpack.c.b16 %v664, %v660
    %v1069 = vpack.c.b16 %v665, %v661
    %v1070 = vpack.c.b16 %v666, %v662
    %v1071 = vpack.c.b16 %v667, %v663
    %v1072 = vpack.c.b16 %v672, %v668
    %v1073 = vpack.c.b16 %v673, %v669
    %v1074 = vpack.c.b16 %v674, %v670
    %v1075 = vpack.c.b16 %v675, %v671
    %v1076 = vpack.c.b16 %v680, %v676
    %v1077 = vpack.c.b16 %v681, %v677
    %v1078 = vpack.c.b16 %v682, %v678
    %v1079 = vpack.c.b16 %v683, %v679
    %v1080 = vpack.c.b16 %v688, %v684
    %v1081 = vpack.c.b16 %v689, %v685
    %v1082 = vpack.c.b16 %v690, %v686
    %v1083 = vpack.c.b16 %v691, %v687
    %v1084 = vpack.c.b16 %v696, %v692
    %v1085 = vpack.c.b16 %v697, %v693
    %v1086 = vpack.c.b16 %v698, %v694
    %v1087 = vpack.c.b16 %v699, %v695
    %v1088 = vpack.c.b16 %v704, %v700
    %v1089 = vpack.c.b16 %v705, %v701
    %v1090 = vpack.c.b16 %v706, %v702
    %v1091 = vpack.c.b16 %v707, %v703
    %v1092 = vpack.c.b16 %v712, %v708
    %v1093 = vpack.c.b16 %v713, %v709
    %v1094 = vpack.c.b16 %v714, %v710
    %v1095 = vpack.c.b16 %v715, %v711
    %v1096 = vpack.c.b16 %v720, %v716
    %v1097 = vpack.c.b16 %v721, %v717
    %v1098 = vpack.c.b16 %v722, %v718
    %v1099 = vpack.c.b16 %v723, %v719
    %v1100 = vpack.c.b16 %v728, %v724
    %v1101 = vpack.c.b16 %v729, %v725
    %v1102 = vpack.c.b16 %v730, %v726
    %v1103 = vpack.c.b16 %v731, %v727
    %v1104 = vpack.c.b16 %v736, %v732
    %v1105 = vpack.c.b16 %v737, %v733
    %v1106 = vpack.c.b16 %v738, %v734
    %v1107 = vpack.c.b16 %v739, %v735
    %v1108 = vpack.c.b16 %v744, %v740
    %v1109 = vpack.c.b16 %v745, %v741
    %v1110 = vpack.c.b16 %v746, %v742
    %v1111 = vpack.c.b16 %v747, %v743
    %v1112 = vpack.c.b16 %v752, %v748
    %v1113 = vpack.c.b16 %v753, %v749
    %v1114 = vpack.c.b16 %v754, %v750
    %v1115 = vpack.c.b16 %v755, %v751
    %v1116 = vpack.c.b16 %v760, %v756
    %v1117 = vpack.c.b16 %v761, %v757
    %v1118 = vpack.c.b16 %v762, %v758
    %v1119 = vpack.c.b16 %v763, %v759
    %v1120 = vpack.c.b16 %v768, %v764
    %v1121 = vpack.c.b16 %v769, %v765
    %v1122 = vpack.c.b16 %v770, %v766
    %v1123 = vpack.c.b16 %v771, %v767
    %v1124 = vpack.c.b16 %v776, %v772
    %v1125 = vpack.c.b16 %v777, %v773
    %v1126 = vpack.c.b16 %v778, %v774
    %v1127 = vpack.c.b16 %v779, %v775
    %v1128 = vpack.c.b16 %v784, %v780
    %v1129 = vpack.c.b16 %v785, %v781
    %v1130 = vpack.c.b16 %v786, %v782
    %v1131 = vpack.c.b16 %v787, %v783
    %v1132 = vpack.c.b16 %v792, %v788
    %v1133 = vpack.c.b16 %v793, %v789
    %v1134 = vpack.c.b16 %v794, %v790
    %v1135 = vpack.c.b16 %v795, %v791
    %v1136 = vpack.c.b16 %v800, %v796
    %v1137 = vpack.c.b16 %v801, %v797
    %v1138 = vpack.c.b16 %v802, %v798
    %v1139 = vpack.c.b16 %v803, %v799
    %v1140 = vpack.c.b16 %v808, %v804
    %v1141 = vpack.c.b16 %v809, %v805
    %v1142 = vpack.c.b16 %v810, %v806
    %v1143 = vpack.c.b16 %v811, %v807
    %v1144 = vpack.c.b16 %v816, %v812
    %v1145 = vpack.c.b16 %v817, %v813
    %v1146 = vpack.c.b16 %v818, %v814
    %v1147 = vpack.c.b16 %v819, %v815
    %v1148 = vpack.c.b16 %v824, %v820
    %v1149 = vpack.c.b16 %v825, %v821
    %v1150 = vpack.c.b16 %v826, %v822
    %v1151 = vpack.c.b16 %v827, %v823
    %v1152 = vpack.c.b16 %v832, %v828
    %v1153 = vpack.c.b16 %v833, %v829
    %v1154 = vpack.c.b16 %v834, %v830
    %v1155 = vpack.c.b16 %v835, %v831
    %v1156 = vpack.c.b16 %v840, %v836
    %v1157 = vpack.c.b16 %v841, %v837
    %v1158 = vpack.c.b16 %v842, %v838
    %v1159 = vpack.c.b16 %v843, %v839
    %v1160 = vpack.c.b16 %v848, %v844
    %v1161 = vpack.c.b16 %v849, %v845
    %v1162 = vpack.c.b16 %v850, %v846
    %v1163 = vpack.c.b16 %v851, %v847
    %v1164 = vpack.c.b16 %v856, %v852
    %v1165 = vpack.c.b16 %v857, %v853
    %v1166 = vpack.c.b16 %v858, %v854
    %v1167 = vpack.c.b16 %v859, %v855
    %v1168 = vpack.c.b16 %v864, %v860
    %v1169 = vpack.c.b16 %v865, %v861
    %v1170 = vpack.c.b16 %v866, %v862
    %v1171 = vpack.c.b16 %v867, %v863
    %v1172 = vpack.c.b16 %v872, %v868
    %v1173 = vpack.c.b16 %v873, %v869
    %v1174 = vpack.c.b16 %v874, %v870
    %v1175 = vpack.c.b16 %v875, %v871
    %v1176 = vpack.c.b16 %v880, %v876
    %v1177 = vpack.c.b16 %v881, %v877
    %v1178 = vpack.c.b16 %v882, %v878
    %v1179 = vpack.c.b16 %v883, %v879
    %v1180 = vpack.c.b16 %v888, %v884
    %v1181 = vpack.c.b16 %v889, %v885
    %v1182 = vpack.c.b16 %v890, %v886
    %v1183 = vpack.c.b16 %v891, %v887
    %v1184 = vpack.c.b16 %v896, %v892
    %v1185 = vpack.c.b16 %v897, %v893
    %v1186 = vpack.c.b16 %v898, %v894
    %v1187 = vpack.c.b16 %v899, %v895
    %v1188 = vpack.c.b16 %v904, %v900
    %v1189 = vpack.c.b16 %v905, %v901
    %v1190 = vpack.c.b16 %v906, %v902
    %v1191 = vpack.c.b16 %v907, %v903
    %v1192 = vpack.c.b16 %v912, %v908
    %v1193 = vpack.c.b16 %v913, %v909
    %v1194 = vpack.c.b16 %v914, %v910
    %v1195 = vpack.c.b16 %v915, %v911
    %v1196 = vpack.c.b16 %v920, %v916
    %v1197 = vpack.c.b16 %v921, %v917
    %v1198 = vpack.c.b16 %v922, %v918
    %v1199 = vpack.c.b16 %v923, %v919
    %v1200 = vpack.c.b16 %v928, %v924
    %v1201 = vpack.c.b16 %v929, %v925
    %v1202 = vpack.c.b16 %v930, %v926
    %v1203 = vpack.c.b16 %v931, %v927
    %v1204 = vpack.c.b16 %v936, %v932
    %v1205 = vpack.c.b16 %v937, %v933
    %v1206 = vpack.c.b16 %v938, %v934
    %v1207 = vpack.c.b16 %v939, %v935
    %v1208 = vpack.c.b16 %v944, %v940
    %v1209 = vpack.c.b16 %v945, %v941
    %v1210 = vpack.c.b16 %v946, %v942
    %v1211 = vpack.c.b16 %v947, %v943
    %v1212 = vpack.c.b16 %v952, %v948
    %v1213 = vpack.c.b16 %v953, %v949
    %v1214 = vpack.c.b16 %v954, %v950
    %v1215 = vpack.c.b16 %v955, %v951
    %v1216 = vpack.c.b16 %v960, %v956
    %v1217 = vpack.c.b16 %v961, %v957
    %v1218 = vpack.c.b16 %v962, %v958
    %v1219 = vpack.c.b16 %v963, %v959
    %v1220 = vpack.c.b16 %v968, %v964
    %v1221 = vpack.c.b16 %v969, %v965
    %v1222 = vpack.c.b16 %v970, %v966
    %v1223 = vpack.c.b16 %v971, %v967
    %v1224 = vpack.c.b16 %v976, %v972
    %v1225 = vpack.c.b16 %v977, %v973
    %v1226 = vpack.c.b16 %v978, %v974
    %v1227 = vpack.c.b16 %v979, %v975
    %v1228 = vpack.c.b16 %v984, %v980
    %v1229 = vpack.c.b16 %v985, %v981
    %v1230 = vpack.c.b16 %v986, %v982
    %v1231 = vpack.c.b16 %v987, %v983
    %v1232 = vpack.c.b16 %v992, %v988
    %v1233 = vpack.c.b16 %v993, %v989
    %v1234 = vpack.c.b16 %v994, %v990
    %v1235 = vpack.c.b16 %v995, %v991
    %v1236 = vpack.c.b16 %v1000, %v996
    %v1237 = vpack.c.b16 %v1001, %v997
    %v1238 = vpack.c.b16 %v1002, %v998
    %v1239 = vpack.c.b16 %v1003, %v999
    %v1240 = vpack.c.b16 %v1008, %v1004
    %v1241 = vpack.c.b16 %v1009, %v1005
    %v1242 = vpack.c.b16 %v1010, %v1006
    %v1243 = vpack.c.b16 %v1011, %v1007
    %v1244 = vpack.c.b16 %v1016, %v1012
    %v1245 = vpack.c.b16 %v1017, %v1013
    %v1246 = vpack.c.b16 %v1018, %v1014
    %v1247 = vpack.c.b16 %v1019, %v1015
    %v1248 = vpack.c.b16 %v1024, %v1020
    %v1249 = vpack.c.b16 %v1025, %v1021
    %v1250 = vpack.c.b16 %v1026, %v1022
    %v1251 = vpack.c.b16 %v1027, %v1023
    %1476 = vmatprep.subr.bf16.mxu0 %v1029
    %1477 = vmatpush1.bf16.msra.mxu0 %v1028
    %1478 = vmatprep.subr.bf16.mxu0 %v1033
    %1479 = vmatpush1.bf16.msra.mxu0 %v1032
    %1480 = vmatprep.subr.bf16.mxu0 %v1037
    %1481 = vmatpush1.bf16.msra.mxu0 %v1036
    %1482 = vmatprep.subr.bf16.mxu0 %v1041
    %1483 = vmatpush1.bf16.msra.mxu0 %v1040
    %1484 = vmatprep.subr.bf16.mxu0 %v1045
    %1485 = vmatpush1.bf16.msra.mxu0 %v1044
    %1486 = vmatprep.subr.bf16.mxu0 %v1049
    %1487 = vmatpush1.bf16.msra.mxu0 %v1048
    %1488 = vmatprep.subr.bf16.mxu0 %v1053
    %1489 = vmatpush1.bf16.msra.mxu0 %v1052
    %1490 = vmatprep.subr.bf16.mxu0 %v1057
    %1491 = vmatpush1.bf16.msra.mxu0 %v1056
    %1492 = vmatprep.subr.bf16.mxu0 %v1061
    %1493 = vmatpush1.bf16.msra.mxu0 %v1060
    %1494 = vmatprep.subr.bf16.mxu0 %v1065
    %1495 = vmatpush1.bf16.msra.mxu0 %v1064
    %1496 = vmatprep.subr.bf16.mxu0 %v1069
    %1497 = vmatpush1.bf16.msra.mxu0 %v1068
    %1498 = vmatprep.subr.bf16.mxu0 %v1073
    %1499 = vmatpush1.bf16.msra.mxu0 %v1072
    %1500 = vmatprep.subr.bf16.mxu0 %v1077
    %1501 = vmatpush1.bf16.msra.mxu0 %v1076
    %1502 = vmatprep.subr.bf16.mxu0 %v1081
    %1503 = vmatpush1.bf16.msra.mxu0 %v1080
    %1504 = vmatprep.subr.bf16.mxu0 %v1085
    %1505 = vmatpush1.bf16.msra.mxu0 %v1084
    %1506 = vmatprep.subr.bf16.mxu0 %v1089
    %1507 = vmatpush1.bf16.msra.mxu0 %v1088
    %1508 = vmatprep.mubr.bf16.mxu0 %v343
    %1509 = vmatmul.mubr.bf16.gmra.mrb[0].mxu0 %v342
    %v1510 = vpop.f32.mrb[0].mxu0
    %v1511 = vadd.f32 %v314, %v1510
    %v1512 = vpop.f32.mrb[0].mxu0
    %v1513 = vadd.f32 %v318, %v1512
    %v1514 = vpop.f32.mrb[0].mxu0
    %v1515 = vpop.f32.mrb[0].mxu0
    %1516 = vdwg.mxu0
    %1517 = vmatprep.subr.bf16.mxu0 %v1093
    %1518 = vmatpush1.bf16.msra.mxu0 %v1092
    %1519 = vmatprep.subr.bf16.mxu0 %v1097
    %1520 = vmatpush1.bf16.msra.mxu0 %v1096
    %1521 = vmatprep.subr.bf16.mxu0 %v1101
    %1522 = vmatpush1.bf16.msra.mxu0 %v1100
    %1523 = vmatprep.subr.bf16.mxu0 %v1105
    %1524 = vmatpush1.bf16.msra.mxu0 %v1104
    %1525 = vmatprep.subr.bf16.mxu0 %v1109
    %1526 = vmatpush1.bf16.msra.mxu0 %v1108
    %1527 = vmatprep.subr.bf16.mxu0 %v1113
    %1528 = vmatpush1.bf16.msra.mxu0 %v1112
    %1529 = vmatprep.subr.bf16.mxu0 %v1117
    %1530 = vmatpush1.bf16.msra.mxu0 %v1116
    %1531 = vmatprep.subr.bf16.mxu0 %v1121
    %1532 = vmatpush1.bf16.msra.mxu0 %v1120
    %1533 = vmatprep.subr.bf16.mxu0 %v1125
    %1534 = vmatpush1.bf16.msra.mxu0 %v1124
    %1535 = vmatprep.subr.bf16.mxu0 %v1129
    %1536 = vmatpush1.bf16.msra.mxu0 %v1128
    %1537 = vmatprep.subr.bf16.mxu0 %v1133
    %1538 = vmatpush1.bf16.msra.mxu0 %v1132
    %1539 = vmatprep.subr.bf16.mxu0 %v1137
    %1540 = vmatpush1.bf16.msra.mxu0 %v1136
    %1541 = vmatprep.subr.bf16.mxu0 %v1141
    %1542 = vmatpush1.bf16.msra.mxu0 %v1140
    %1543 = vmatprep.subr.bf16.mxu0 %v1145
    %1544 = vmatpush1.bf16.msra.mxu0 %v1144
    %1545 = vmatprep.subr.bf16.mxu0 %v1149
    %1546 = vmatpush1.bf16.msra.mxu0 %v1148
    %1547 = vmatprep.subr.bf16.mxu0 %v1153
    %1548 = vmatpush1.bf16.msra.mxu0 %v1152
    %1549 = vmatprep.mubr.bf16.mxu0 %v345
    %1550 = vmatmul.mubr.bf16.gmra.mrb[0].mxu0 %v344
    %v1551 = vpop.f32.mrb[0].mxu0
    %v1552 = vadd.f32 %v1511, %v1551
    %v1553 = vpop.f32.mrb[0].mxu0
    %v1554 = vadd.f32 %v1513, %v1553
    %v1555 = vpop.f32.mrb[0].mxu0
    %v1556 = vpop.f32.mrb[0].mxu0
    %1557 = vdwg.mxu0
    %1558 = vmatprep.subr.bf16.mxu0 %v1157
    %1559 = vmatpush1.bf16.msra.mxu0 %v1156
    %1560 = vmatprep.subr.bf16.mxu0 %v1161
    %1561 = vmatpush1.bf16.msra.mxu0 %v1160
    %1562 = vmatprep.subr.bf16.mxu0 %v1165
    %1563 = vmatpush1.bf16.msra.mxu0 %v1164
    %1564 = vmatprep.subr.bf16.mxu0 %v1169
    %1565 = vmatpush1.bf16.msra.mxu0 %v1168
    %1566 = vmatprep.subr.bf16.mxu0 %v1173
    %1567 = vmatpush1.bf16.msra.mxu0 %v1172
    %1568 = vmatprep.subr.bf16.mxu0 %v1177
    %1569 = vmatpush1.bf16.msra.mxu0 %v1176
    %1570 = vmatprep.subr.bf16.mxu0 %v1181
    %1571 = vmatpush1.bf16.msra.mxu0 %v1180
    %1572 = vmatprep.subr.bf16.mxu0 %v1185
    %1573 = vmatpush1.bf16.msra.mxu0 %v1184
    %1574 = vmatprep.subr.bf16.mxu0 %v1189
    %1575 = vmatpush1.bf16.msra.mxu0 %v1188
    %1576 = vmatprep.subr.bf16.mxu0 %v1193
    %1577 = vmatpush1.bf16.msra.mxu0 %v1192
    %1578 = vmatprep.subr.bf16.mxu0 %v1197
    %1579 = vmatpush1.bf16.msra.mxu0 %v1196
    %1580 = vmatprep.subr.bf16.mxu0 %v1201
    %1581 = vmatpush1.bf16.msra.mxu0 %v1200
    %1582 = vmatprep.subr.bf16.mxu0 %v1205
    %1583 = vmatpush1.bf16.msra.mxu0 %v1204
    %1584 = vmatprep.subr.bf16.mxu0 %v1209
    %1585 = vmatpush1.bf16.msra.mxu0 %v1208
    %1586 = vmatprep.subr.bf16.mxu0 %v1213
    %1587 = vmatpush1.bf16.msra.mxu0 %v1212
    %1588 = vmatprep.subr.bf16.mxu0 %v1217
    %1589 = vmatpush1.bf16.msra.mxu0 %v1216
    %1590 = vmatprep.mubr.bf16.mxu0 %v347
    %1591 = vmatmul.mubr.bf16.gmra.mrb[0].mxu0 %v346
    %v1592 = vpop.f32.mrb[0].mxu0
    %v1593 = vadd.f32 %v1552, %v1592
    %v1594 = vpop.f32.mrb[0].mxu0
    %v1595 = vadd.f32 %v1554, %v1594
    %v1596 = vpop.f32.mrb[0].mxu0
    %v1597 = vpop.f32.mrb[0].mxu0
    %1598 = vdwg.mxu0
    %1599 = vmatprep.subr.bf16.mxu0 %v1221
    %1600 = vmatpush1.bf16.msra.mxu0 %v1220
    %1601 = vmatprep.subr.bf16.mxu0 %v1225
    %1602 = vmatpush1.bf16.msra.mxu0 %v1224
    %1603 = vmatprep.subr.bf16.mxu0 %v1229
    %1604 = vmatpush1.bf16.msra.mxu0 %v1228
    %1605 = vmatprep.subr.bf16.mxu0 %v1233
    %1606 = vmatpush1.bf16.msra.mxu0 %v1232
    %1607 = vmatprep.subr.bf16.mxu0 %v1237
    %1608 = vmatpush1.bf16.msra.mxu0 %v1236
    %1609 = vmatprep.subr.bf16.mxu0 %v1241
    %1610 = vmatpush1.bf16.msra.mxu0 %v1240
    %1611 = vmatprep.subr.bf16.mxu0 %v1245
    %1612 = vmatpush1.bf16.msra.mxu0 %v1244
    %1613 = vmatprep.subr.bf16.mxu0 %v1249
    %1614 = vmatpush1.bf16.msra.mxu0 %v1248
    %1615 = vmatprep.subr.bf16.mxu0 0
    %1616 = vmatpush1.bf16.msra.mxu0 0
    %1617 = vmatprep.subr.bf16.mxu0 0
    %1618 = vmatpush1.bf16.msra.mxu0 0
    %1619 = vmatprep.subr.bf16.mxu0 0
    %1620 = vmatpush1.bf16.msra.mxu0 0
    %1621 = vmatprep.subr.bf16.mxu0 0
    %1622 = vmatpush1.bf16.msra.mxu0 0
    %1623 = vmatprep.subr.bf16.mxu0 0
    %1624 = vmatpush1.bf16.msra.mxu0 0
    %1625 = vmatprep.subr.bf16.mxu0 0
    %1626 = vmatpush1.bf16.msra.mxu0 0
    %1627 = vmatprep.subr.bf16.mxu0 0
    %1628 = vmatpush1.bf16.msra.mxu0 0
    %1629 = vmatprep.subr.bf16.mxu0 0
    %1630 = vmatpush1.bf16.msra.mxu0 0
    %1631 = vmatprep.mubr.bf16.mxu0 0
    %1632 = vmatmul.mubr.bf16.gmra.mrb[0].mxu0 %v348
    %v1633 = vpop.f32.mrb[0].mxu0
    %v1634 = vadd.f32 %v1593, %v1633
    %v1635 = vpop.f32.mrb[0].mxu0
    %v1636 = vadd.f32 %v1595, %v1635
    %v1637 = vpop.f32.mrb[0].mxu0
    %v1638 = vpop.f32.mrb[0].mxu0
    %1639 = vdwg.mxu0
    %1640 = vmatprep.subr.bf16.mxu0 %v1031
    %1641 = vmatpush1.bf16.msra.mxu0 %v1030
    %1642 = vmatprep.subr.bf16.mxu0 %v1035
    %1643 = vmatpush1.bf16.msra.mxu0 %v1034
    %1644 = vmatprep.subr.bf16.mxu0 %v1039
    %1645 = vmatpush1.bf16.msra.mxu0 %v1038
    %1646 = vmatprep.subr.bf16.mxu0 %v1043
    %1647 = vmatpush1.bf16.msra.mxu0 %v1042
    %1648 = vmatprep.subr.bf16.mxu0 %v1047
    %1649 = vmatpush1.bf16.msra.mxu0 %v1046
    %1650 = vmatprep.subr.bf16.mxu0 %v1051
    %1651 = vmatpush1.bf16.msra.mxu0 %v1050
    %1652 = vmatprep.subr.bf16.mxu0 %v1055
    %1653 = vmatpush1.bf16.msra.mxu0 %v1054
    %1654 = vmatprep.subr.bf16.mxu0 %v1059
    %1655 = vmatpush1.bf16.msra.mxu0 %v1058
    %1656 = vmatprep.subr.bf16.mxu0 %v1063
    %1657 = vmatpush1.bf16.msra.mxu0 %v1062
    %1658 = vmatprep.subr.bf16.mxu0 %v1067
    %1659 = vmatpush1.bf16.msra.mxu0 %v1066
    %1660 = vmatprep.subr.bf16.mxu0 %v1071
    %1661 = vmatpush1.bf16.msra.mxu0 %v1070
    %1662 = vmatprep.subr.bf16.mxu0 %v1075
    %1663 = vmatpush1.bf16.msra.mxu0 %v1074
    %1664 = vmatprep.subr.bf16.mxu0 %v1079
    %1665 = vmatpush1.bf16.msra.mxu0 %v1078
    %1666 = vmatprep.subr.bf16.mxu0 %v1083
    %1667 = vmatpush1.bf16.msra.mxu0 %v1082
    %1668 = vmatprep.subr.bf16.mxu0 %v1087
    %1669 = vmatpush1.bf16.msra.mxu0 %v1086
    %1670 = vmatprep.subr.bf16.mxu0 %v1091
    %1671 = vmatpush1.bf16.msra.mxu0 %v1090
    %1672 = vmatprep.mubr.bf16.mxu0 %v343
    %1673 = vmatmul.mubr.bf16.gmra.mrb[0].mxu0 %v342
    %v1674 = vpop.f32.mrb[0].mxu0
    %v1675 = vadd.f32 %v322, %v1674
    %v1676 = vpop.f32.mrb[0].mxu0
    %v1677 = vadd.f32 %v326, %v1676
    %v1678 = vpop.f32.mrb[0].mxu0
    %v1679 = vpop.f32.mrb[0].mxu0
    %1680 = vdwg.mxu0
    %1681 = vmatprep.subr.bf16.mxu0 %v1095
    %1682 = vmatpush1.bf16.msra.mxu0 %v1094
    %1683 = vmatprep.subr.bf16.mxu0 %v1099
    %1684 = vmatpush1.bf16.msra.mxu0 %v1098
    %1685 = vmatprep.subr.bf16.mxu0 %v1103
    %1686 = vmatpush1.bf16.msra.mxu0 %v1102
    %1687 = vmatprep.subr.bf16.mxu0 %v1107
    %1688 = vmatpush1.bf16.msra.mxu0 %v1106
    %1689 = vmatprep.subr.bf16.mxu0 %v1111
    %1690 = vmatpush1.bf16.msra.mxu0 %v1110
    %1691 = vmatprep.subr.bf16.mxu0 %v1115
    %1692 = vmatpush1.bf16.msra.mxu0 %v1114
    %1693 = vmatprep.subr.bf16.mxu0 %v1119
    %1694 = vmatpush1.bf16.msra.mxu0 %v1118
    %1695 = vmatprep.subr.bf16.mxu0 %v1123
    %1696 = vmatpush1.bf16.msra.mxu0 %v1122
    %1697 = vmatprep.subr.bf16.mxu0 %v1127
    %1698 = vmatpush1.bf16.msra.mxu0 %v1126
    %1699 = vmatprep.subr.bf16.mxu0 %v1131
    %1700 = vmatpush1.bf16.msra.mxu0 %v1130
    %1701 = vmatprep.subr.bf16.mxu0 %v1135
    %1702 = vmatpush1.bf16.msra.mxu0 %v1134
    %1703 = vmatprep.subr.bf16.mxu0 %v1139
    %1704 = vmatpush1.bf16.msra.mxu0 %v1138
    %1705 = vmatprep.subr.bf16.mxu0 %v1143
    %1706 = vmatpush1.bf16.msra.mxu0 %v1142
    %1707 = vmatprep.subr.bf16.mxu0 %v1147
    %1708 = vmatpush1.bf16.msra.mxu0 %v1146
    %1709 = vmatprep.subr.bf16.mxu0 %v1151
    %1710 = vmatpush1.bf16.msra.mxu0 %v1150
    %1711 = vmatprep.subr.bf16.mxu0 %v1155
    %1712 = vmatpush1.bf16.msra.mxu0 %v1154
    %1713 = vmatprep.mubr.bf16.mxu0 %v345
    %1714 = vmatmul.mubr.bf16.gmra.mrb[0].mxu0 %v344
    %v1715 = vpop.f32.mrb[0].mxu0
    %v1716 = vadd.f32 %v1675, %v1715
    %v1717 = vpop.f32.mrb[0].mxu0
    %v1718 = vadd.f32 %v1677, %v1717
    %v1719 = vpop.f32.mrb[0].mxu0
    %v1720 = vpop.f32.mrb[0].mxu0
    %1721 = vdwg.mxu0
    %1722 = vmatprep.subr.bf16.mxu0 %v1159
    %1723 = vmatpush1.bf16.msra.mxu0 %v1158
    %1724 = vmatprep.subr.bf16.mxu0 %v1163
    %1725 = vmatpush1.bf16.msra.mxu0 %v1162
    %1726 = vmatprep.subr.bf16.mxu0 %v1167
    %1727 = vmatpush1.bf16.msra.mxu0 %v1166
    %1728 = vmatprep.subr.bf16.mxu0 %v1171
    %1729 = vmatpush1.bf16.msra.mxu0 %v1170
    %1730 = vmatprep.subr.bf16.mxu0 %v1175
    %1731 = vmatpush1.bf16.msra.mxu0 %v1174
    %1732 = vmatprep.subr.bf16.mxu0 %v1179
    %1733 = vmatpush1.bf16.msra.mxu0 %v1178
    %1734 = vmatprep.subr.bf16.mxu0 %v1183
    %1735 = vmatpush1.bf16.msra.mxu0 %v1182
    %1736 = vmatprep.subr.bf16.mxu0 %v1187
    %1737 = vmatpush1.bf16.msra.mxu0 %v1186
    %1738 = vmatprep.subr.bf16.mxu0 %v1191
    %1739 = vmatpush1.bf16.msra.mxu0 %v1190
    %1740 = vmatprep.subr.bf16.mxu0 %v1195
    %1741 = vmatpush1.bf16.msra.mxu0 %v1194
    %1742 = vmatprep.subr.bf16.mxu0 %v1199
    %1743 = vmatpush1.bf16.msra.mxu0 %v1198
    %1744 = vmatprep.subr.bf16.mxu0 %v1203
    %1745 = vmatpush1.bf16.msra.mxu0 %v1202
    %1746 = vmatprep.subr.bf16.mxu0 %v1207
    %1747 = vmatpush1.bf16.msra.mxu0 %v1206
    %1748 = vmatprep.subr.bf16.mxu0 %v1211
    %1749 = vmatpush1.bf16.msra.mxu0 %v1210
    %1750 = vmatprep.subr.bf16.mxu0 %v1215
    %1751 = vmatpush1.bf16.msra.mxu0 %v1214
    %1752 = vmatprep.subr.bf16.mxu0 %v1219
    %1753 = vmatpush1.bf16.msra.mxu0 %v1218
    %1754 = vmatprep.mubr.bf16.mxu0 %v347
    %1755 = vmatmul.mubr.bf16.gmra.mrb[0].mxu0 %v346
    %v1756 = vpop.f32.mrb[0].mxu0
    %v1757 = vadd.f32 %v1716, %v1756
    %v1758 = vpop.f32.mrb[0].mxu0
    %v1759 = vadd.f32 %v1718, %v1758
    %v1760 = vpop.f32.mrb[0].mxu0
    %v1761 = vpop.f32.mrb[0].mxu0
    %1762 = vdwg.mxu0
    %1763 = vmatprep.subr.bf16.mxu0 %v1223
    %1764 = vmatpush1.bf16.msra.mxu0 %v1222
    %1765 = vmatprep.subr.bf16.mxu0 %v1227
    %1766 = vmatpush1.bf16.msra.mxu0 %v1226
    %1767 = vmatprep.subr.bf16.mxu0 %v1231
    %1768 = vmatpush1.bf16.msra.mxu0 %v1230
    %1769 = vmatprep.subr.bf16.mxu0 %v1235
    %1770 = vmatpush1.bf16.msra.mxu0 %v1234
    %1771 = vmatprep.subr.bf16.mxu0 %v1239
    %1772 = vmatpush1.bf16.msra.mxu0 %v1238
    %1773 = vmatprep.subr.bf16.mxu0 %v1243
    %1774 = vmatpush1.bf16.msra.mxu0 %v1242
    %1775 = vmatprep.subr.bf16.mxu0 %v1247
    %1776 = vmatpush1.bf16.msra.mxu0 %v1246
    %1777 = vmatprep.subr.bf16.mxu0 %v1251
    %1778 = vmatpush1.bf16.msra.mxu0 %v1250
    %1779 = vmatprep.subr.bf16.mxu0 0
    %1780 = vmatpush1.bf16.msra.mxu0 0
    %1781 = vmatprep.subr.bf16.mxu0 0
    %1782 = vmatpush1.bf16.msra.mxu0 0
    %1783 = vmatprep.subr.bf16.mxu0 0
    %1784 = vmatpush1.bf16.msra.mxu0 0
    %1785 = vmatprep.subr.bf16.mxu0 0
    %1786 = vmatpush1.bf16.msra.mxu0 0
    %1787 = vmatprep.subr.bf16.mxu0 0
    %1788 = vmatpush1.bf16.msra.mxu0 0
    %1789 = vmatprep.subr.bf16.mxu0 0
    %1790 = vmatpush1.bf16.msra.mxu0 0
    %1791 = vmatprep.subr.bf16.mxu0 0
    %1792 = vmatpush1.bf16.msra.mxu0 0
    %1793 = vmatprep.subr.bf16.mxu0 0
    %1794 = vmatpush1.bf16.msra.mxu0 0
    %1795 = vmatprep.mubr.bf16.mxu0 0
    %1796 = vmatmul.mubr.bf16.gmra.mrb[0].mxu0 %v348
    %v1797 = vpop.f32.mrb[0].mxu0
    %v1798 = vadd.f32 %v1757, %v1797
    %v1799 = vpop.f32.mrb[0].mxu0
    %v1800 = vadd.f32 %v1759, %v1799
    %v1801 = vpop.f32.mrb[0].mxu0
    %v1802 = vpop.f32.mrb[0].mxu0
    %1803 = vdwg.mxu0
    %v1804 = vmax.f32 %v1634, 0.0
    %v1805 = vmax.f32 %v1636, 0.0
    %v1806 = vmax.f32 %v1798, 0.0
    %v1807 = vmax.f32 %v1800, 0.0
    %v1808 = vpack.c.bf16 %v1804, %v1804
    %v1809 = vpack.c.bf16 %v1805, %v1805
    %v1810 = vpack.c.bf16 %v1806, %v1806
    %v1811 = vpack.c.bf16 %v1807, %v1807
    %v1812 = vld [vmem:[#allocation7] sm:$0xff]
    %v1813 = vld [vmem:[#allocation7 + $0x8] sm:$0xff]
    %v1814 = vld [vmem:[#allocation7 + $0x10] sm:$0xff]
    %v1815 = vld [vmem:[#allocation7 + $0x18] sm:$0xff]
    %v1816 = vld [vmem:[#allocation7 + $0x20] sm:$0xff]
    %v1817 = vld [vmem:[#allocation7 + $0x28] sm:$0xff]
    %v1818 = vld [vmem:[#allocation7 + $0x30] sm:$0xff]
    %v1819 = vld [vmem:[#allocation7 + $0x38] sm:$0xff]
    %v1820 = vld [vmem:[#allocation7 + $0x40] sm:$0xff]
    %v1821 = vld [vmem:[#allocation7 + $0x48] sm:$0xff]
    %v1822 = vld [vmem:[#allocation7 + $0x50] sm:$0xff]
    %v1823 = vld [vmem:[#allocation7 + $0x58] sm:$0xff]
    %v1824 = vld [vmem:[#allocation7 + $0x60] sm:$0xff]
    %v1825 = vld [vmem:[#allocation7 + $0x68] sm:$0xff]
    %v1826 = vld [vmem:[#allocation7 + $0x70] sm:$0xff]
    %v1827 = vld [vmem:[#allocation7 + $0x78] sm:$0xff]
    %v1828 = vld [vmem:[#allocation7 + $0x80] sm:$0xff]
    %v1829 = vld [vmem:[#allocation7 + $0x88] sm:$0xff]
    %v1830 = vld [vmem:[#allocation7 + $0x90] sm:$0xff]
    %v1831 = vld [vmem:[#allocation7 + $0x98] sm:$0xff]
    %v1832 = vld [vmem:[#allocation7 + $0xa0] sm:$0xff]
    %v1833 = vld [vmem:[#allocation7 + $0xa8] sm:$0xff]
    %v1834 = vld [vmem:[#allocation7 + $0xb0] sm:$0xff]
    %v1835 = vld [vmem:[#allocation7 + $0xb8] sm:$0xff]
    %v1836 = vld [vmem:[#allocation7 + $0xc0] sm:$0xff]
    %v1837 = vld [vmem:[#allocation7 + $0xc8] sm:$0xff]
    %v1838 = vld [vmem:[#allocation7 + $0xd0] sm:$0xff]
    %v1839 = vld [vmem:[#allocation7 + $0xd8] sm:$0xff]
    %v1840 = vld [vmem:[#allocation7 + $0xe0] sm:$0xff]
    %v1841 = vld [vmem:[#allocation7 + $0xe8] sm:$0xff]
    %v1842 = vld [vmem:[#allocation7 + $0xf0] sm:$0xff]
    %v1843 = vld [vmem:[#allocation7 + $0xf8] sm:$0xff]
    %v1844 = vld [vmem:[#allocation7 + $0x100] sm:$0xff]
    %v1845 = vld [vmem:[#allocation7 + $0x108] sm:$0xff]
    %v1846 = vld [vmem:[#allocation7 + $0x110] sm:$0xff]
    %v1847 = vld [vmem:[#allocation7 + $0x118] sm:$0xff]
    %v1848 = vld [vmem:[#allocation7 + $0x120] sm:$0xff]
    %v1849 = vld [vmem:[#allocation7 + $0x128] sm:$0xff]
    %v1850 = vld [vmem:[#allocation7 + $0x130] sm:$0xff]
    %v1851 = vld [vmem:[#allocation7 + $0x138] sm:$0xff]
    %v1852 = vld [vmem:[#allocation7 + $0x140] sm:$0xff]
    %v1853 = vld [vmem:[#allocation7 + $0x148] sm:$0xff]
    %v1854 = vld [vmem:[#allocation7 + $0x150] sm:$0xff]
    %v1855 = vld [vmem:[#allocation7 + $0x158] sm:$0xff]
    %v1856 = vld [vmem:[#allocation7 + $0x160] sm:$0xff]
    %v1857 = vld [vmem:[#allocation7 + $0x168] sm:$0xff]
    %v1858 = vld [vmem:[#allocation7 + $0x170] sm:$0xff]
    %v1859 = vld [vmem:[#allocation7 + $0x178] sm:$0xff]
    %v1860 = vld [vmem:[#allocation7 + $0x180] sm:$0xff]
    %v1861 = vld [vmem:[#allocation7 + $0x188] sm:$0xff]
    %v1862 = vld [vmem:[#allocation7 + $0x190] sm:$0xff]
    %v1863 = vld [vmem:[#allocation7 + $0x198] sm:$0xff]
    %v1864 = vld [vmem:[#allocation7 + $0x1a0] sm:$0xff]
    %v1865 = vld [vmem:[#allocation7 + $0x1a8] sm:$0xff]
    %v1866 = vld [vmem:[#allocation7 + $0x1b0] sm:$0xff]
    %v1867 = vld [vmem:[#allocation7 + $0x1b8] sm:$0xff]
    %v1868 = vld [vmem:[#allocation7 + $0x1c0] sm:$0xff]
    %v1869 = vld [vmem:[#allocation7 + $0x1c8] sm:$0xff]
    %v1870 = vld [vmem:[#allocation7 + $0x1d0] sm:$0xff]
    %v1871 = vld [vmem:[#allocation7 + $0x1d8] sm:$0xff]
    %v1872 = vld [vmem:[#allocation7 + $0x1e0] sm:$0xff]
    %v1873 = vld [vmem:[#allocation7 + $0x1e8] sm:$0xff]
    %v1874 = vld [vmem:[#allocation7 + $0x1f0] sm:$0xff]
    %v1875 = vld [vmem:[#allocation7 + $0x1f8] sm:$0xff]
    %v1876 = vld [vmem:[#allocation7 + $0x200] sm:$0xff]
    %v1877 = vld [vmem:[#allocation7 + $0x208] sm:$0xff]
    %v1878 = vld [vmem:[#allocation7 + $0x210] sm:$0xff]
    %v1879 = vld [vmem:[#allocation7 + $0x218] sm:$0xff]
    %v1880 = vld [vmem:[#allocation7 + $0x220] sm:$0xff]
    %v1881 = vld [vmem:[#allocation7 + $0x228] sm:$0xff]
    %v1882 = vld [vmem:[#allocation7 + $0x230] sm:$0xff]
    %v1883 = vld [vmem:[#allocation7 + $0x238] sm:$0xff]
    %v1884 = vld [vmem:[#allocation7 + $0x240] sm:$0xff]
    %v1885 = vld [vmem:[#allocation7 + $0x248] sm:$0xff]
    %v1886 = vld [vmem:[#allocation7 + $0x250] sm:$0xff]
    %v1887 = vld [vmem:[#allocation7 + $0x258] sm:$0xff]
    %v1888 = vld [vmem:[#allocation7 + $0x260] sm:$0xff]
    %v1889 = vld [vmem:[#allocation7 + $0x268] sm:$0xff]
    %v1890 = vld [vmem:[#allocation7 + $0x270] sm:$0xff]
    %v1891 = vld [vmem:[#allocation7 + $0x278] sm:$0xff]
    %v1892 = vld [vmem:[#allocation7 + $0x280] sm:$0xff]
    %v1893 = vld [vmem:[#allocation7 + $0x288] sm:$0xff]
    %v1894 = vld [vmem:[#allocation7 + $0x290] sm:$0xff]
    %v1895 = vld [vmem:[#allocation7 + $0x298] sm:$0xff]
    %v1896 = vld [vmem:[#allocation7 + $0x2a0] sm:$0xff]
    %v1897 = vld [vmem:[#allocation7 + $0x2a8] sm:$0xff]
    %v1898 = vld [vmem:[#allocation7 + $0x2b0] sm:$0xff]
    %v1899 = vld [vmem:[#allocation7 + $0x2b8] sm:$0xff]
    %v1900 = vld [vmem:[#allocation7 + $0x2c0] sm:$0xff]
    %v1901 = vld [vmem:[#allocation7 + $0x2c8] sm:$0xff]
    %v1902 = vld [vmem:[#allocation7 + $0x2d0] sm:$0xff]
    %v1903 = vld [vmem:[#allocation7 + $0x2d8] sm:$0xff]
    %v1904 = vld [vmem:[#allocation7 + $0x2e0] sm:$0xff]
    %v1905 = vld [vmem:[#allocation7 + $0x2e8] sm:$0xff]
    %v1906 = vld [vmem:[#allocation7 + $0x2f0] sm:$0xff]
    %v1907 = vld [vmem:[#allocation7 + $0x2f8] sm:$0xff]
    %v1908 = vld [vmem:[#allocation7 + $0x300] sm:$0xff]
    %v1909 = vld [vmem:[#allocation7 + $0x308] sm:$0xff]
    %v1910 = vld [vmem:[#allocation7 + $0x310] sm:$0xff]
    %v1911 = vld [vmem:[#allocation7 + $0x318] sm:$0xff]
    %v1912 = vld [vmem:[#allocation7 + $0x320] sm:$0xff]
    %v1913 = vld [vmem:[#allocation7 + $0x328] sm:$0xff]
    %v1914 = vld [vmem:[#allocation7 + $0x330] sm:$0xff]
    %v1915 = vld [vmem:[#allocation7 + $0x338] sm:$0xff]
    %v1916 = vld [vmem:[#allocation7 + $0x340] sm:$0xff]
    %v1917 = vld [vmem:[#allocation7 + $0x348] sm:$0xff]
    %v1918 = vld [vmem:[#allocation7 + $0x350] sm:$0xff]
    %v1919 = vld [vmem:[#allocation7 + $0x358] sm:$0xff]
    %v1920 = vld [vmem:[#allocation7 + $0x360] sm:$0xff]
    %v1921 = vld [vmem:[#allocation7 + $0x368] sm:$0xff]
    %v1922 = vld [vmem:[#allocation7 + $0x370] sm:$0xff]
    %v1923 = vld [vmem:[#allocation7 + $0x378] sm:$0xff]
    %v1924 = vld [vmem:[#allocation7 + $0x380] sm:$0xff]
    %v1925 = vld [vmem:[#allocation7 + $0x388] sm:$0xff]
    %v1926 = vld [vmem:[#allocation7 + $0x390] sm:$0xff]
    %v1927 = vld [vmem:[#allocation7 + $0x398] sm:$0xff]
    %v1928 = vld [vmem:[#allocation7 + $0x3a0] sm:$0xff]
    %v1929 = vld [vmem:[#allocation7 + $0x3a8] sm:$0xff]
    %v1930 = vld [vmem:[#allocation7 + $0x3b0] sm:$0xff]
    %v1931 = vld [vmem:[#allocation7 + $0x3b8] sm:$0xff]
    %v1932 = vld [vmem:[#allocation7 + $0x3c0] sm:$0xff]
    %v1933 = vld [vmem:[#allocation7 + $0x3c8] sm:$0xff]
    %v1934 = vld [vmem:[#allocation7 + $0x3d0] sm:$0xff]
    %v1935 = vld [vmem:[#allocation7 + $0x3d8] sm:$0xff]
    %v1936 = vld [vmem:[#allocation7 + $0x3e0] sm:$0xff]
    %v1937 = vld [vmem:[#allocation7 + $0x3e8] sm:$0xff]
    %v1938 = vld [vmem:[#allocation7 + $0x3f0] sm:$0xff]
    %v1939 = vld [vmem:[#allocation7 + $0x3f8] sm:$0xff]
    %v1940 = vld [vmem:[%s4] sm:$0xf]
    %v1942 = vlaneseq
    %v1943 = vshrl.u32 %v1942, 7
    %v1944 = vsub.s32 0, %v1943
    %v1945 = vrot.slane %v1940, %v1944
    %v1946 = vlaneseq
    %v1947 = vshrl.u32 %v1946, 7
    %v1948 = vsub.s32 1, %v1947
    %v1949 = vrot.slane %v1940, %v1948
    %v1950 = vlaneseq
    %v1951 = vshrl.u32 %v1950, 7
    %v1952 = vsub.s32 2, %v1951
    %v1953 = vrot.slane %v1940, %v1952
    %v1954 = vlaneseq
    %v1955 = vshrl.u32 %v1954, 7
    %v1956 = vsub.s32 3, %v1955
    %v1957 = vrot.slane %v1940, %v1956
    %v2090 = vunpack.c.l.b16 %v1812
    %v2091 = vunpack.c.h.b16 %v1812
    %v2092 = vunpack.c.l.b16 %v1813
    %v2093 = vunpack.c.h.b16 %v1813
    %v2094 = vunpack.c.l.b16 %v1814
    %v2095 = vunpack.c.h.b16 %v1814
    %v2096 = vunpack.c.l.b16 %v1815
    %v2097 = vunpack.c.h.b16 %v1815
    %v2098 = vunpack.c.l.b16 %v1816
    %v2099 = vunpack.c.h.b16 %v1816
    %v2100 = vunpack.c.l.b16 %v1817
    %v2101 = vunpack.c.h.b16 %v1817
    %v2102 = vunpack.c.l.b16 %v1818
    %v2103 = vunpack.c.h.b16 %v1818
    %v2104 = vunpack.c.l.b16 %v1819
    %v2105 = vunpack.c.h.b16 %v1819
    %v2106 = vunpack.c.l.b16 %v1820
    %v2107 = vunpack.c.h.b16 %v1820
    %v2108 = vunpack.c.l.b16 %v1821
    %v2109 = vunpack.c.h.b16 %v1821
    %v2110 = vunpack.c.l.b16 %v1822
    %v2111 = vunpack.c.h.b16 %v1822
    %v2112 = vunpack.c.l.b16 %v1823
    %v2113 = vunpack.c.h.b16 %v1823
    %v2114 = vunpack.c.l.b16 %v1824
    %v2115 = vunpack.c.h.b16 %v1824
    %v2116 = vunpack.c.l.b16 %v1825
    %v2117 = vunpack.c.h.b16 %v1825
    %v2118 = vunpack.c.l.b16 %v1826
    %v2119 = vunpack.c.h.b16 %v1826
    %v2120 = vunpack.c.l.b16 %v1827
    %v2121 = vunpack.c.h.b16 %v1827
    %v2122 = vunpack.c.l.b16 %v1828
    %v2123 = vunpack.c.h.b16 %v1828
    %v2124 = vunpack.c.l.b16 %v1829
    %v2125 = vunpack.c.h.b16 %v1829
    %v2126 = vunpack.c.l.b16 %v1830
    %v2127 = vunpack.c.h.b16 %v1830
    %v2128 = vunpack.c.l.b16 %v1831
    %v2129 = vunpack.c.h.b16 %v1831
    %v2130 = vunpack.c.l.b16 %v1832
    %v2131 = vunpack.c.h.b16 %v1832
    %v2132 = vunpack.c.l.b16 %v1833
    %v2133 = vunpack.c.h.b16 %v1833
    %v2134 = vunpack.c.l.b16 %v1834
    %v2135 = vunpack.c.h.b16 %v1834
    %v2136 = vunpack.c.l.b16 %v1835
    %v2137 = vunpack.c.h.b16 %v1835
    %v2138 = vunpack.c.l.b16 %v1836
    %v2139 = vunpack.c.h.b16 %v1836
    %v2140 = vunpack.c.l.b16 %v1837
    %v2141 = vunpack.c.h.b16 %v1837
    %v2142 = vunpack.c.l.b16 %v1838
    %v2143 = vunpack.c.h.b16 %v1838
    %v2144 = vunpack.c.l.b16 %v1839
    %v2145 = vunpack.c.h.b16 %v1839
    %v2146 = vunpack.c.l.b16 %v1840
    %v2147 = vunpack.c.h.b16 %v1840
    %v2148 = vunpack.c.l.b16 %v1841
    %v2149 = vunpack.c.h.b16 %v1841
    %v2150 = vunpack.c.l.b16 %v1842
    %v2151 = vunpack.c.h.b16 %v1842
    %v2152 = vunpack.c.l.b16 %v1843
    %v2153 = vunpack.c.h.b16 %v1843
    %v2154 = vunpack.c.l.b16 %v1844
    %v2155 = vunpack.c.h.b16 %v1844
    %v2156 = vunpack.c.l.b16 %v1845
    %v2157 = vunpack.c.h.b16 %v1845
    %v2158 = vunpack.c.l.b16 %v1846
    %v2159 = vunpack.c.h.b16 %v1846
    %v2160 = vunpack.c.l.b16 %v1847
    %v2161 = vunpack.c.h.b16 %v1847
    %v2162 = vunpack.c.l.b16 %v1848
    %v2163 = vunpack.c.h.b16 %v1848
    %v2164 = vunpack.c.l.b16 %v1849
    %v2165 = vunpack.c.h.b16 %v1849
    %v2166 = vunpack.c.l.b16 %v1850
    %v2167 = vunpack.c.h.b16 %v1850
    %v2168 = vunpack.c.l.b16 %v1851
    %v2169 = vunpack.c.h.b16 %v1851
    %v2170 = vunpack.c.l.b16 %v1852
    %v2171 = vunpack.c.h.b16 %v1852
    %v2172 = vunpack.c.l.b16 %v1853
    %v2173 = vunpack.c.h.b16 %v1853
    %v2174 = vunpack.c.l.b16 %v1854
    %v2175 = vunpack.c.h.b16 %v1854
    %v2176 = vunpack.c.l.b16 %v1855
    %v2177 = vunpack.c.h.b16 %v1855
    %v2178 = vunpack.c.l.b16 %v1856
    %v2179 = vunpack.c.h.b16 %v1856
    %v2180 = vunpack.c.l.b16 %v1857
    %v2181 = vunpack.c.h.b16 %v1857
    %v2182 = vunpack.c.l.b16 %v1858
    %v2183 = vunpack.c.h.b16 %v1858
    %v2184 = vunpack.c.l.b16 %v1859
    %v2185 = vunpack.c.h.b16 %v1859
    %v2186 = vunpack.c.l.b16 %v1860
    %v2187 = vunpack.c.h.b16 %v1860
    %v2188 = vunpack.c.l.b16 %v1861
    %v2189 = vunpack.c.h.b16 %v1861
    %v2190 = vunpack.c.l.b16 %v1862
    %v2191 = vunpack.c.h.b16 %v1862
    %v2192 = vunpack.c.l.b16 %v1863
    %v2193 = vunpack.c.h.b16 %v1863
    %v2194 = vunpack.c.l.b16 %v1864
    %v2195 = vunpack.c.h.b16 %v1864
    %v2196 = vunpack.c.l.b16 %v1865
    %v2197 = vunpack.c.h.b16 %v1865
    %v2198 = vunpack.c.l.b16 %v1866
    %v2199 = vunpack.c.h.b16 %v1866
    %v2200 = vunpack.c.l.b16 %v1867
    %v2201 = vunpack.c.h.b16 %v1867
    %v2202 = vunpack.c.l.b16 %v1868
    %v2203 = vunpack.c.h.b16 %v1868
    %v2204 = vunpack.c.l.b16 %v1869
    %v2205 = vunpack.c.h.b16 %v1869
    %v2206 = vunpack.c.l.b16 %v1870
    %v2207 = vunpack.c.h.b16 %v1870
    %v2208 = vunpack.c.l.b16 %v1871
    %v2209 = vunpack.c.h.b16 %v1871
    %v2210 = vunpack.c.l.b16 %v1872
    %v2211 = vunpack.c.h.b16 %v1872
    %v2212 = vunpack.c.l.b16 %v1873
    %v2213 = vunpack.c.h.b16 %v1873
    %v2214 = vunpack.c.l.b16 %v1874
    %v2215 = vunpack.c.h.b16 %v1874
    %v2216 = vunpack.c.l.b16 %v1875
    %v2217 = vunpack.c.h.b16 %v1875
    %v2218 = vunpack.c.l.b16 %v1876
    %v2219 = vunpack.c.h.b16 %v1876
    %v2220 = vunpack.c.l.b16 %v1877
    %v2221 = vunpack.c.h.b16 %v1877
    %v2222 = vunpack.c.l.b16 %v1878
    %v2223 = vunpack.c.h.b16 %v1878
    %v2224 = vunpack.c.l.b16 %v1879
    %v2225 = vunpack.c.h.b16 %v1879
    %v2226 = vunpack.c.l.b16 %v1880
    %v2227 = vunpack.c.h.b16 %v1880
    %v2228 = vunpack.c.l.b16 %v1881
    %v2229 = vunpack.c.h.b16 %v1881
    %v2230 = vunpack.c.l.b16 %v1882
    %v2231 = vunpack.c.h.b16 %v1882
    %v2232 = vunpack.c.l.b16 %v1883
    %v2233 = vunpack.c.h.b16 %v1883
    %v2234 = vunpack.c.l.b16 %v1884
    %v2235 = vunpack.c.h.b16 %v1884
    %v2236 = vunpack.c.l.b16 %v1885
    %v2237 = vunpack.c.h.b16 %v1885
    %v2238 = vunpack.c.l.b16 %v1886
    %v2239 = vunpack.c.h.b16 %v1886
    %v2240 = vunpack.c.l.b16 %v1887
    %v2241 = vunpack.c.h.b16 %v1887
    %v2242 = vunpack.c.l.b16 %v1888
    %v2243 = vunpack.c.h.b16 %v1888
    %v2244 = vunpack.c.l.b16 %v1889
    %v2245 = vunpack.c.h.b16 %v1889
    %v2246 = vunpack.c.l.b16 %v1890
    %v2247 = vunpack.c.h.b16 %v1890
    %v2248 = vunpack.c.l.b16 %v1891
    %v2249 = vunpack.c.h.b16 %v1891
    %v2250 = vunpack.c.l.b16 %v1892
    %v2251 = vunpack.c.h.b16 %v1892
    %v2252 = vunpack.c.l.b16 %v1893
    %v2253 = vunpack.c.h.b16 %v1893
    %v2254 = vunpack.c.l.b16 %v1894
    %v2255 = vunpack.c.h.b16 %v1894
    %v2256 = vunpack.c.l.b16 %v1895
    %v2257 = vunpack.c.h.b16 %v1895
    %v2258 = vunpack.c.l.b16 %v1896
    %v2259 = vunpack.c.h.b16 %v1896
    %v2260 = vunpack.c.l.b16 %v1897
    %v2261 = vunpack.c.h.b16 %v1897
    %v2262 = vunpack.c.l.b16 %v1898
    %v2263 = vunpack.c.h.b16 %v1898
    %v2264 = vunpack.c.l.b16 %v1899
    %v2265 = vunpack.c.h.b16 %v1899
    %v2266 = vunpack.c.l.b16 %v1900
    %v2267 = vunpack.c.h.b16 %v1900
    %v2268 = vunpack.c.l.b16 %v1901
    %v2269 = vunpack.c.h.b16 %v1901
    %v2270 = vunpack.c.l.b16 %v1902
    %v2271 = vunpack.c.h.b16 %v1902
    %v2272 = vunpack.c.l.b16 %v1903
    %v2273 = vunpack.c.h.b16 %v1903
    %v2274 = vunpack.c.l.b16 %v1904
    %v2275 = vunpack.c.h.b16 %v1904
    %v2276 = vunpack.c.l.b16 %v1905
    %v2277 = vunpack.c.h.b16 %v1905
    %v2278 = vunpack.c.l.b16 %v1906
    %v2279 = vunpack.c.h.b16 %v1906
    %v2280 = vunpack.c.l.b16 %v1907
    %v2281 = vunpack.c.h.b16 %v1907
    %v2282 = vunpack.c.l.b16 %v1908
    %v2283 = vunpack.c.h.b16 %v1908
    %v2284 = vunpack.c.l.b16 %v1909
    %v2285 = vunpack.c.h.b16 %v1909
    %v2286 = vunpack.c.l.b16 %v1910
    %v2287 = vunpack.c.h.b16 %v1910
    %v2288 = vunpack.c.l.b16 %v1911
    %v2289 = vunpack.c.h.b16 %v1911
    %v2290 = vunpack.c.l.b16 %v1912
    %v2291 = vunpack.c.h.b16 %v1912
    %v2292 = vunpack.c.l.b16 %v1913
    %v2293 = vunpack.c.h.b16 %v1913
    %v2294 = vunpack.c.l.b16 %v1914
    %v2295 = vunpack.c.h.b16 %v1914
    %v2296 = vunpack.c.l.b16 %v1915
    %v2297 = vunpack.c.h.b16 %v1915
    %v2298 = vunpack.c.l.b16 %v1916
    %v2299 = vunpack.c.h.b16 %v1916
    %v2300 = vunpack.c.l.b16 %v1917
    %v2301 = vunpack.c.h.b16 %v1917
    %v2302 = vunpack.c.l.b16 %v1918
    %v2303 = vunpack.c.h.b16 %v1918
    %v2304 = vunpack.c.l.b16 %v1919
    %v2305 = vunpack.c.h.b16 %v1919
    %v2306 = vunpack.c.l.b16 %v1920
    %v2307 = vunpack.c.h.b16 %v1920
    %v2308 = vunpack.c.l.b16 %v1921
    %v2309 = vunpack.c.h.b16 %v1921
    %v2310 = vunpack.c.l.b16 %v1922
    %v2311 = vunpack.c.h.b16 %v1922
    %v2312 = vunpack.c.l.b16 %v1923
    %v2313 = vunpack.c.h.b16 %v1923
    %v2314 = vunpack.c.l.b16 %v1924
    %v2315 = vunpack.c.h.b16 %v1924
    %v2316 = vunpack.c.l.b16 %v1925
    %v2317 = vunpack.c.h.b16 %v1925
    %v2318 = vunpack.c.l.b16 %v1926
    %v2319 = vunpack.c.h.b16 %v1926
    %v2320 = vunpack.c.l.b16 %v1927
    %v2321 = vunpack.c.h.b16 %v1927
    %v2322 = vunpack.c.l.b16 %v1928
    %v2323 = vunpack.c.h.b16 %v1928
    %v2324 = vunpack.c.l.b16 %v1929
    %v2325 = vunpack.c.h.b16 %v1929
    %v2326 = vunpack.c.l.b16 %v1930
    %v2327 = vunpack.c.h.b16 %v1930
    %v2328 = vunpack.c.l.b16 %v1931
    %v2329 = vunpack.c.h.b16 %v1931
    %v2330 = vunpack.c.l.b16 %v1932
    %v2331 = vunpack.c.h.b16 %v1932
    %v2332 = vunpack.c.l.b16 %v1933
    %v2333 = vunpack.c.h.b16 %v1933
    %v2334 = vunpack.c.l.b16 %v1934
    %v2335 = vunpack.c.h.b16 %v1934
    %v2336 = vunpack.c.l.b16 %v1935
    %v2337 = vunpack.c.h.b16 %v1935
    %v2338 = vunpack.c.l.b16 %v1936
    %v2339 = vunpack.c.h.b16 %v1936
    %v2340 = vunpack.c.l.b16 %v1937
    %v2341 = vunpack.c.h.b16 %v1937
    %v2342 = vunpack.c.l.b16 %v1938
    %v2343 = vunpack.c.h.b16 %v1938
    %v2344 = vunpack.c.l.b16 %v1939
    %v2345 = vunpack.c.h.b16 %v1939
    %v2346 = vpack.c.b16 %v2094, %v2090
    %v2347 = vpack.c.b16 %v2095, %v2091
    %v2348 = vpack.c.b16 %v2096, %v2092
    %v2349 = vpack.c.b16 %v2097, %v2093
    %v2350 = vpack.c.b16 %v2102, %v2098
    %v2351 = vpack.c.b16 %v2103, %v2099
    %v2352 = vpack.c.b16 %v2104, %v2100
    %v2353 = vpack.c.b16 %v2105, %v2101
    %v2354 = vpack.c.b16 %v2110, %v2106
    %v2355 = vpack.c.b16 %v2111, %v2107
    %v2356 = vpack.c.b16 %v2112, %v2108
    %v2357 = vpack.c.b16 %v2113, %v2109
    %v2358 = vpack.c.b16 %v2118, %v2114
    %v2359 = vpack.c.b16 %v2119, %v2115
    %v2360 = vpack.c.b16 %v2120, %v2116
    %v2361 = vpack.c.b16 %v2121, %v2117
    %v2362 = vpack.c.b16 %v2126, %v2122
    %v2363 = vpack.c.b16 %v2127, %v2123
    %v2364 = vpack.c.b16 %v2128, %v2124
    %v2365 = vpack.c.b16 %v2129, %v2125
    %v2366 = vpack.c.b16 %v2134, %v2130
    %v2367 = vpack.c.b16 %v2135, %v2131
    %v2368 = vpack.c.b16 %v2136, %v2132
    %v2369 = vpack.c.b16 %v2137, %v2133
    %v2370 = vpack.c.b16 %v2142, %v2138
    %v2371 = vpack.c.b16 %v2143, %v2139
    %v2372 = vpack.c.b16 %v2144, %v2140
    %v2373 = vpack.c.b16 %v2145, %v2141
    %v2374 = vpack.c.b16 %v2150, %v2146
    %v2375 = vpack.c.b16 %v2151, %v2147
    %v2376 = vpack.c.b16 %v2152, %v2148
    %v2377 = vpack.c.b16 %v2153, %v2149
    %v2378 = vpack.c.b16 %v2158, %v2154
    %v2379 = vpack.c.b16 %v2159, %v2155
    %v2380 = vpack.c.b16 %v2160, %v2156
    %v2381 = vpack.c.b16 %v2161, %v2157
    %v2382 = vpack.c.b16 %v2166, %v2162
    %v2383 = vpack.c.b16 %v2167, %v2163
    %v2384 = vpack.c.b16 %v2168, %v2164
    %v2385 = vpack.c.b16 %v2169, %v2165
    %v2386 = vpack.c.b16 %v2174, %v2170
    %v2387 = vpack.c.b16 %v2175, %v2171
    %v2388 = vpack.c.b16 %v2176, %v2172
    %v2389 = vpack.c.b16 %v2177, %v2173
    %v2390 = vpack.c.b16 %v2182, %v2178
    %v2391 = vpack.c.b16 %v2183, %v2179
    %v2392 = vpack.c.b16 %v2184, %v2180
    %v2393 = vpack.c.b16 %v2185, %v2181
    %v2394 = vpack.c.b16 %v2190, %v2186
    %v2395 = vpack.c.b16 %v2191, %v2187
    %v2396 = vpack.c.b16 %v2192, %v2188
    %v2397 = vpack.c.b16 %v2193, %v2189
    %v2398 = vpack.c.b16 %v2198, %v2194
    %v2399 = vpack.c.b16 %v2199, %v2195
    %v2400 = vpack.c.b16 %v2200, %v2196
    %v2401 = vpack.c.b16 %v2201, %v2197
    %v2402 = vpack.c.b16 %v2206, %v2202
    %v2403 = vpack.c.b16 %v2207, %v2203
    %v2404 = vpack.c.b16 %v2208, %v2204
    %v2405 = vpack.c.b16 %v2209, %v2205
    %v2406 = vpack.c.b16 %v2214, %v2210
    %v2407 = vpack.c.b16 %v2215, %v2211
    %v2408 = vpack.c.b16 %v2216, %v2212
    %v2409 = vpack.c.b16 %v2217, %v2213
    %v2410 = vpack.c.b16 %v2222, %v2218
    %v2411 = vpack.c.b16 %v2223, %v2219
    %v2412 = vpack.c.b16 %v2224, %v2220
    %v2413 = vpack.c.b16 %v2225, %v2221
    %v2414 = vpack.c.b16 %v2230, %v2226
    %v2415 = vpack.c.b16 %v2231, %v2227
    %v2416 = vpack.c.b16 %v2232, %v2228
    %v2417 = vpack.c.b16 %v2233, %v2229
    %v2418 = vpack.c.b16 %v2238, %v2234
    %v2419 = vpack.c.b16 %v2239, %v2235
    %v2420 = vpack.c.b16 %v2240, %v2236
    %v2421 = vpack.c.b16 %v2241, %v2237
    %v2422 = vpack.c.b16 %v2246, %v2242
    %v2423 = vpack.c.b16 %v2247, %v2243
    %v2424 = vpack.c.b16 %v2248, %v2244
    %v2425 = vpack.c.b16 %v2249, %v2245
    %v2426 = vpack.c.b16 %v2254, %v2250
    %v2427 = vpack.c.b16 %v2255, %v2251
    %v2428 = vpack.c.b16 %v2256, %v2252
    %v2429 = vpack.c.b16 %v2257, %v2253
    %v2430 = vpack.c.b16 %v2262, %v2258
    %v2431 = vpack.c.b16 %v2263, %v2259
    %v2432 = vpack.c.b16 %v2264, %v2260
    %v2433 = vpack.c.b16 %v2265, %v2261
    %v2434 = vpack.c.b16 %v2270, %v2266
    %v2435 = vpack.c.b16 %v2271, %v2267
    %v2436 = vpack.c.b16 %v2272, %v2268
    %v2437 = vpack.c.b16 %v2273, %v2269
    %v2438 = vpack.c.b16 %v2278, %v2274
    %v2439 = vpack.c.b16 %v2279, %v2275
    %v2440 = vpack.c.b16 %v2280, %v2276
    %v2441 = vpack.c.b16 %v2281, %v2277
    %v2442 = vpack.c.b16 %v2286, %v2282
    %v2443 = vpack.c.b16 %v2287, %v2283
    %v2444 = vpack.c.b16 %v2288, %v2284
    %v2445 = vpack.c.b16 %v2289, %v2285
    %v2446 = vpack.c.b16 %v2294, %v2290
    %v2447 = vpack.c.b16 %v2295, %v2291
    %v2448 = vpack.c.b16 %v2296, %v2292
    %v2449 = vpack.c.b16 %v2297, %v2293
    %v2450 = vpack.c.b16 %v2302, %v2298
    %v2451 = vpack.c.b16 %v2303, %v2299
    %v2452 = vpack.c.b16 %v2304, %v2300
    %v2453 = vpack.c.b16 %v2305, %v2301
    %v2454 = vpack.c.b16 %v2310, %v2306
    %v2455 = vpack.c.b16 %v2311, %v2307
    %v2456 = vpack.c.b16 %v2312, %v2308
    %v2457 = vpack.c.b16 %v2313, %v2309
    %v2458 = vpack.c.b16 %v2318, %v2314
    %v2459 = vpack.c.b16 %v2319, %v2315
    %v2460 = vpack.c.b16 %v2320, %v2316
    %v2461 = vpack.c.b16 %v2321, %v2317
    %v2462 = vpack.c.b16 %v2326, %v2322
    %v2463 = vpack.c.b16 %v2327, %v2323
    %v2464 = vpack.c.b16 %v2328, %v2324
    %v2465 = vpack.c.b16 %v2329, %v2325
    %v2466 = vpack.c.b16 %v2334, %v2330
    %v2467 = vpack.c.b16 %v2335, %v2331
    %v2468 = vpack.c.b16 %v2336, %v2332
    %v2469 = vpack.c.b16 %v2337, %v2333
    %v2470 = vpack.c.b16 %v2342, %v2338
    %v2471 = vpack.c.b16 %v2343, %v2339
    %v2472 = vpack.c.b16 %v2344, %v2340
    %v2473 = vpack.c.b16 %v2345, %v2341
    %2602 = vmatprep.subr.bf16.mxu0 %v2347
    %2603 = vmatpush1.bf16.msra.mxu0 %v2346
    %2604 = vmatprep.subr.bf16.mxu0 %v2351
    %2605 = vmatpush1.bf16.msra.mxu0 %v2350
    %2606 = vmatprep.subr.bf16.mxu0 %v2355
    %2607 = vmatpush1.bf16.msra.mxu0 %v2354
    %2608 = vmatprep.subr.bf16.mxu0 %v2359
    %2609 = vmatpush1.bf16.msra.mxu0 %v2358
    %2610 = vmatprep.subr.bf16.mxu0 %v2363
    %2611 = vmatpush1.bf16.msra.mxu0 %v2362
    %2612 = vmatprep.subr.bf16.mxu0 %v2367
    %2613 = vmatpush1.bf16.msra.mxu0 %v2366
    %2614 = vmatprep.subr.bf16.mxu0 %v2371
    %2615 = vmatpush1.bf16.msra.mxu0 %v2370
    %2616 = vmatprep.subr.bf16.mxu0 %v2375
    %2617 = vmatpush1.bf16.msra.mxu0 %v2374
    %2618 = vmatprep.subr.bf16.mxu0 %v2379
    %2619 = vmatpush1.bf16.msra.mxu0 %v2378
    %2620 = vmatprep.subr.bf16.mxu0 %v2383
    %2621 = vmatpush1.bf16.msra.mxu0 %v2382
    %2622 = vmatprep.subr.bf16.mxu0 %v2387
    %2623 = vmatpush1.bf16.msra.mxu0 %v2386
    %2624 = vmatprep.subr.bf16.mxu0 %v2391
    %2625 = vmatpush1.bf16.msra.mxu0 %v2390
    %2626 = vmatprep.subr.bf16.mxu0 %v2395
    %2627 = vmatpush1.bf16.msra.mxu0 %v2394
    %2628 = vmatprep.subr.bf16.mxu0 %v2399
    %2629 = vmatpush1.bf16.msra.mxu0 %v2398
    %2630 = vmatprep.subr.bf16.mxu0 %v2403
    %2631 = vmatpush1.bf16.msra.mxu0 %v2402
    %2632 = vmatprep.subr.bf16.mxu0 %v2407
    %2633 = vmatpush1.bf16.msra.mxu0 %v2406
    %2634 = vmatprep.mubr.bf16.mxu0 %v1809
    %2635 = vmatmul.mubr.bf16.gmra.mrb[0].mxu0 %v1808
    %v2636 = vpop.f32.mrb[0].mxu0
    %v2637 = vadd.f32 %v1945, %v2636
    %v2638 = vpop.f32.mrb[0].mxu0
    %v2639 = vadd.f32 %v1949, %v2638
    %v2640 = vpop.f32.mrb[0].mxu0
    %v2641 = vpop.f32.mrb[0].mxu0
    %2642 = vdwg.mxu0
    %2643 = vmatprep.subr.bf16.mxu0 %v2411
    %2644 = vmatpush1.bf16.msra.mxu0 %v2410
    %2645 = vmatprep.subr.bf16.mxu0 %v2415
    %2646 = vmatpush1.bf16.msra.mxu0 %v2414
    %2647 = vmatprep.subr.bf16.mxu0 %v2419
    %2648 = vmatpush1.bf16.msra.mxu0 %v2418
    %2649 = vmatprep.subr.bf16.mxu0 %v2423
    %2650 = vmatpush1.bf16.msra.mxu0 %v2422
    %2651 = vmatprep.subr.bf16.mxu0 %v2427
    %2652 = vmatpush1.bf16.msra.mxu0 %v2426
    %2653 = vmatprep.subr.bf16.mxu0 %v2431
    %2654 = vmatpush1.bf16.msra.mxu0 %v2430
    %2655 = vmatprep.subr.bf16.mxu0 %v2435
    %2656 = vmatpush1.bf16.msra.mxu0 %v2434
    %2657 = vmatprep.subr.bf16.mxu0 %v2439
    %2658 = vmatpush1.bf16.msra.mxu0 %v2438
    %2659 = vmatprep.subr.bf16.mxu0 %v2443
    %2660 = vmatpush1.bf16.msra.mxu0 %v2442
    %2661 = vmatprep.subr.bf16.mxu0 %v2447
    %2662 = vmatpush1.bf16.msra.mxu0 %v2446
    %2663 = vmatprep.subr.bf16.mxu0 %v2451
    %2664 = vmatpush1.bf16.msra.mxu0 %v2450
    %2665 = vmatprep.subr.bf16.mxu0 %v2455
    %2666 = vmatpush1.bf16.msra.mxu0 %v2454
    %2667 = vmatprep.subr.bf16.mxu0 %v2459
    %2668 = vmatpush1.bf16.msra.mxu0 %v2458
    %2669 = vmatprep.subr.bf16.mxu0 %v2463
    %2670 = vmatpush1.bf16.msra.mxu0 %v2462
    %2671 = vmatprep.subr.bf16.mxu0 %v2467
    %2672 = vmatpush1.bf16.msra.mxu0 %v2466
    %2673 = vmatprep.subr.bf16.mxu0 %v2471
    %2674 = vmatpush1.bf16.msra.mxu0 %v2470
    %2675 = vmatprep.mubr.bf16.mxu0 %v1811
    %2676 = vmatmul.mubr.bf16.gmra.mrb[0].mxu0 %v1810
    %v2677 = vpop.f32.mrb[0].mxu0
    %v2678 = vadd.f32 %v2637, %v2677
    %v2679 = vpop.f32.mrb[0].mxu0
    %v2680 = vadd.f32 %v2639, %v2679
    %v2681 = vpop.f32.mrb[0].mxu0
    %v2682 = vpop.f32.mrb[0].mxu0
    %2683 = vdwg.mxu0
    %2684 = vmatprep.subr.bf16.mxu0 %v2349
    %2685 = vmatpush1.bf16.msra.mxu0 %v2348
    %2686 = vmatprep.subr.bf16.mxu0 %v2353
    %2687 = vmatpush1.bf16.msra.mxu0 %v2352
    %2688 = vmatprep.subr.bf16.mxu0 %v2357
    %2689 = vmatpush1.bf16.msra.mxu0 %v2356
    %2690 = vmatprep.subr.bf16.mxu0 %v2361
    %2691 = vmatpush1.bf16.msra.mxu0 %v2360
    %2692 = vmatprep.subr.bf16.mxu0 %v2365
    %2693 = vmatpush1.bf16.msra.mxu0 %v2364
    %2694 = vmatprep.subr.bf16.mxu0 %v2369
    %2695 = vmatpush1.bf16.msra.mxu0 %v2368
    %2696 = vmatprep.subr.bf16.mxu0 %v2373
    %2697 = vmatpush1.bf16.msra.mxu0 %v2372
    %2698 = vmatprep.subr.bf16.mxu0 %v2377
    %2699 = vmatpush1.bf16.msra.mxu0 %v2376
    %2700 = vmatprep.subr.bf16.mxu0 %v2381
    %2701 = vmatpush1.bf16.msra.mxu0 %v2380
    %2702 = vmatprep.subr.bf16.mxu0 %v2385
    %2703 = vmatpush1.bf16.msra.mxu0 %v2384
    %2704 = vmatprep.subr.bf16.mxu0 %v2389
    %2705 = vmatpush1.bf16.msra.mxu0 %v2388
    %2706 = vmatprep.subr.bf16.mxu0 %v2393
    %2707 = vmatpush1.bf16.msra.mxu0 %v2392
    %2708 = vmatprep.subr.bf16.mxu0 %v2397
    %2709 = vmatpush1.bf16.msra.mxu0 %v2396
    %2710 = vmatprep.subr.bf16.mxu0 %v2401
    %2711 = vmatpush1.bf16.msra.mxu0 %v2400
    %2712 = vmatprep.subr.bf16.mxu0 %v2405
    %2713 = vmatpush1.bf16.msra.mxu0 %v2404
    %2714 = vmatprep.subr.bf16.mxu0 %v2409
    %2715 = vmatpush1.bf16.msra.mxu0 %v2408
    %2716 = vmatprep.mubr.bf16.mxu0 %v1809
    %2717 = vmatmul.mubr.bf16.gmra.mrb[0].mxu0 %v1808
    %v2718 = vpop.f32.mrb[0].mxu0
    %v2719 = vadd.f32 %v1953, %v2718
    %v2720 = vpop.f32.mrb[0].mxu0
    %v2721 = vadd.f32 %v1957, %v2720
    %v2722 = vpop.f32.mrb[0].mxu0
    %v2723 = vpop.f32.mrb[0].mxu0
    %2724 = vdwg.mxu0
    %2725 = vmatprep.subr.bf16.mxu0 %v2413
    %2726 = vmatpush1.bf16.msra.mxu0 %v2412
    %2727 = vmatprep.subr.bf16.mxu0 %v2417
    %2728 = vmatpush1.bf16.msra.mxu0 %v2416
    %2729 = vmatprep.subr.bf16.mxu0 %v2421
    %2730 = vmatpush1.bf16.msra.mxu0 %v2420
    %2731 = vmatprep.subr.bf16.mxu0 %v2425
    %2732 = vmatpush1.bf16.msra.mxu0 %v2424
    %2733 = vmatprep.subr.bf16.mxu0 %v2429
    %2734 = vmatpush1.bf16.msra.mxu0 %v2428
    %2735 = vmatprep.subr.bf16.mxu0 %v2433
    %2736 = vmatpush1.bf16.msra.mxu0 %v2432
    %2737 = vmatprep.subr.bf16.mxu0 %v2437
    %2738 = vmatpush1.bf16.msra.mxu0 %v2436
    %2739 = vmatprep.subr.bf16.mxu0 %v2441
    %2740 = vmatpush1.bf16.msra.mxu0 %v2440
    %2741 = vmatprep.subr.bf16.mxu0 %v2445
    %2742 = vmatpush1.bf16.msra.mxu0 %v2444
    %2743 = vmatprep.subr.bf16.mxu0 %v2449
    %2744 = vmatpush1.bf16.msra.mxu0 %v2448
    %2745 = vmatprep.subr.bf16.mxu0 %v2453
    %2746 = vmatpush1.bf16.msra.mxu0 %v2452
    %2747 = vmatprep.subr.bf16.mxu0 %v2457
    %2748 = vmatpush1.bf16.msra.mxu0 %v2456
    %2749 = vmatprep.subr.bf16.mxu0 %v2461
    %2750 = vmatpush1.bf16.msra.mxu0 %v2460
    %2751 = vmatprep.subr.bf16.mxu0 %v2465
    %2752 = vmatpush1.bf16.msra.mxu0 %v2464
    %2753 = vmatprep.subr.bf16.mxu0 %v2469
    %2754 = vmatpush1.bf16.msra.mxu0 %v2468
    %2755 = vmatprep.subr.bf16.mxu0 %v2473
    %2756 = vmatpush1.bf16.msra.mxu0 %v2472
    %2757 = vmatprep.mubr.bf16.mxu0 %v1811
    %2758 = vmatmul.mubr.bf16.gmra.mrb[0].mxu0 %v1810
    %v2759 = vpop.f32.mrb[0].mxu0
    %v2760 = vadd.f32 %v2719, %v2759
    %v2761 = vpop.f32.mrb[0].mxu0
    %v2762 = vadd.f32 %v2721, %v2761
    %v2763 = vpop.f32.mrb[0].mxu0
    %v2764 = vpop.f32.mrb[0].mxu0
    %2765 = vdwg.mxu0
    %v2766 = vmax.f32 %v2678, 0.0
    %v2767 = vmax.f32 %v2680, 0.0
    %v2768 = vmax.f32 %v2760, 0.0
    %v2769 = vmax.f32 %v2762, 0.0
    %v2770 = vpack.c.bf16 %v2766, %v2766
    %v2771 = vpack.c.bf16 %v2767, %v2767
    %v2772 = vpack.c.bf16 %v2768, %v2768
    %v2773 = vpack.c.bf16 %v2769, %v2769
    %v2774 = vld [vmem:[#allocation8] sm:$0xf]
    %v2775 = vld [vmem:[#allocation8 + $0x4] sm:$0xf]
    %v2776 = vld [vmem:[#allocation8 + $0x8] sm:$0xf]
    %v2777 = vld [vmem:[#allocation8 + $0xc] sm:$0xf]
    %v2778 = vld [vmem:[#allocation8 + $0x10] sm:$0xf]
    %v2779 = vld [vmem:[#allocation8 + $0x14] sm:$0xf]
    %v2780 = vld [vmem:[#allocation8 + $0x18] sm:$0xf]
    %v2781 = vld [vmem:[#allocation8 + $0x1c] sm:$0xf]
    %v2782 = vld [vmem:[#allocation8 + $0x20] sm:$0xf]
    %v2783 = vld [vmem:[#allocation8 + $0x24] sm:$0xf]
    %v2784 = vld [vmem:[#allocation8 + $0x28] sm:$0xf]
    %v2785 = vld [vmem:[#allocation8 + $0x2c] sm:$0xf]
    %v2786 = vld [vmem:[#allocation8 + $0x30] sm:$0xf]
    %v2787 = vld [vmem:[#allocation8 + $0x34] sm:$0xf]
    %v2788 = vld [vmem:[#allocation8 + $0x38] sm:$0xf]
    %v2789 = vld [vmem:[#allocation8 + $0x3c] sm:$0xf]
    %v2790 = vld [vmem:[#allocation8 + $0x40] sm:$0xf]
    %v2791 = vld [vmem:[#allocation8 + $0x44] sm:$0xf]
    %v2792 = vld [vmem:[#allocation8 + $0x48] sm:$0xf]
    %v2793 = vld [vmem:[#allocation8 + $0x4c] sm:$0xf]
    %v2794 = vld [vmem:[#allocation8 + $0x50] sm:$0xf]
    %v2795 = vld [vmem:[#allocation8 + $0x54] sm:$0xf]
    %v2796 = vld [vmem:[#allocation8 + $0x58] sm:$0xf]
    %v2797 = vld [vmem:[#allocation8 + $0x5c] sm:$0xf]
    %v2798 = vld [vmem:[#allocation8 + $0x60] sm:$0xf]
    %v2799 = vld [vmem:[#allocation8 + $0x64] sm:$0xf]
    %v2800 = vld [vmem:[#allocation8 + $0x68] sm:$0xf]
    %v2801 = vld [vmem:[#allocation8 + $0x6c] sm:$0xf]
    %v2802 = vld [vmem:[#allocation8 + $0x70] sm:$0xf]
    %v2803 = vld [vmem:[#allocation8 + $0x74] sm:$0xf]
    %v2804 = vld [vmem:[#allocation8 + $0x78] sm:$0xf]
    %v2805 = vld [vmem:[#allocation8 + $0x7c] sm:$0xf]
    %v2806 = vld [vmem:[#allocation8 + $0x80] sm:$0xf]
    %v2807 = vld [vmem:[#allocation8 + $0x84] sm:$0xf]
    %v2808 = vld [vmem:[#allocation8 + $0x88] sm:$0xf]
    %v2809 = vld [vmem:[#allocation8 + $0x8c] sm:$0xf]
    %v2810 = vld [vmem:[#allocation8 + $0x90] sm:$0xf]
    %v2811 = vld [vmem:[#allocation8 + $0x94] sm:$0xf]
    %v2812 = vld [vmem:[#allocation8 + $0x98] sm:$0xf]
    %v2813 = vld [vmem:[#allocation8 + $0x9c] sm:$0xf]
    %v2814 = vld [vmem:[#allocation8 + $0xa0] sm:$0xf]
    %v2815 = vld [vmem:[#allocation8 + $0xa4] sm:$0xf]
    %v2816 = vld [vmem:[#allocation8 + $0xa8] sm:$0xf]
    %v2817 = vld [vmem:[#allocation8 + $0xac] sm:$0xf]
    %v2818 = vld [vmem:[#allocation8 + $0xb0] sm:$0xf]
    %v2819 = vld [vmem:[#allocation8 + $0xb4] sm:$0xf]
    %v2820 = vld [vmem:[#allocation8 + $0xb8] sm:$0xf]
    %v2821 = vld [vmem:[#allocation8 + $0xbc] sm:$0xf]
    %v2822 = vld [vmem:[#allocation8 + $0xc0] sm:$0xf]
    %v2823 = vld [vmem:[#allocation8 + $0xc4] sm:$0xf]
    %v2824 = vld [vmem:[#allocation8 + $0xc8] sm:$0xf]
    %v2825 = vld [vmem:[#allocation8 + $0xcc] sm:$0xf]
    %v2826 = vld [vmem:[#allocation8 + $0xd0] sm:$0xf]
    %v2827 = vld [vmem:[#allocation8 + $0xd4] sm:$0xf]
    %v2828 = vld [vmem:[#allocation8 + $0xd8] sm:$0xf]
    %v2829 = vld [vmem:[#allocation8 + $0xdc] sm:$0xf]
    %v2830 = vld [vmem:[#allocation8 + $0xe0] sm:$0xf]
    %v2831 = vld [vmem:[#allocation8 + $0xe4] sm:$0xf]
    %v2832 = vld [vmem:[#allocation8 + $0xe8] sm:$0xf]
    %v2833 = vld [vmem:[#allocation8 + $0xec] sm:$0xf]
    %v2834 = vld [vmem:[#allocation8 + $0xf0] sm:$0xf]
    %v2835 = vld [vmem:[#allocation8 + $0xf4] sm:$0xf]
    %v2836 = vld [vmem:[#allocation8 + $0xf8] sm:$0xf]
    %v2837 = vld [vmem:[#allocation8 + $0xfc] sm:$0xf]
    %v2838 = vld [vmem:[%s6] sm:$0x1]
    %v2840 = vlaneseq
    %v2841 = vshrl.u32 %v2840, 7
    %v2842 = vsub.s32 0, %v2841
    %v2843 = vrot.slane %v2838, %v2842
    %v2909 = vunpack.c.l.b16 %v2774
    %v2910 = vunpack.c.l.b16 %v2775
    %v2911 = vunpack.c.l.b16 %v2776
    %v2912 = vunpack.c.l.b16 %v2777
    %v2913 = vunpack.c.l.b16 %v2778
    %v2914 = vunpack.c.l.b16 %v2779
    %v2915 = vunpack.c.l.b16 %v2780
    %v2916 = vunpack.c.l.b16 %v2781
    %v2917 = vunpack.c.l.b16 %v2782
    %v2918 = vunpack.c.l.b16 %v2783
    %v2919 = vunpack.c.l.b16 %v2784
    %v2920 = vunpack.c.l.b16 %v2785
    %v2921 = vunpack.c.l.b16 %v2786
    %v2922 = vunpack.c.l.b16 %v2787
    %v2923 = vunpack.c.l.b16 %v2788
    %v2924 = vunpack.c.l.b16 %v2789
    %v2925 = vunpack.c.l.b16 %v2790
    %v2926 = vunpack.c.l.b16 %v2791
    %v2927 = vunpack.c.l.b16 %v2792
    %v2928 = vunpack.c.l.b16 %v2793
    %v2929 = vunpack.c.l.b16 %v2794
    %v2930 = vunpack.c.l.b16 %v2795
    %v2931 = vunpack.c.l.b16 %v2796
    %v2932 = vunpack.c.l.b16 %v2797
    %v2933 = vunpack.c.l.b16 %v2798
    %v2934 = vunpack.c.l.b16 %v2799
    %v2935 = vunpack.c.l.b16 %v2800
    %v2936 = vunpack.c.l.b16 %v2801
    %v2937 = vunpack.c.l.b16 %v2802
    %v2938 = vunpack.c.l.b16 %v2803
    %v2939 = vunpack.c.l.b16 %v2804
    %v2940 = vunpack.c.l.b16 %v2805
    %v2941 = vunpack.c.l.b16 %v2806
    %v2942 = vunpack.c.l.b16 %v2807
    %v2943 = vunpack.c.l.b16 %v2808
    %v2944 = vunpack.c.l.b16 %v2809
    %v2945 = vunpack.c.l.b16 %v2810
    %v2946 = vunpack.c.l.b16 %v2811
    %v2947 = vunpack.c.l.b16 %v2812
    %v2948 = vunpack.c.l.b16 %v2813
    %v2949 = vunpack.c.l.b16 %v2814
    %v2950 = vunpack.c.l.b16 %v2815
    %v2951 = vunpack.c.l.b16 %v2816
    %v2952 = vunpack.c.l.b16 %v2817
    %v2953 = vunpack.c.l.b16 %v2818
    %v2954 = vunpack.c.l.b16 %v2819
    %v2955 = vunpack.c.l.b16 %v2820
    %v2956 = vunpack.c.l.b16 %v2821
    %v2957 = vunpack.c.l.b16 %v2822
    %v2958 = vunpack.c.l.b16 %v2823
    %v2959 = vunpack.c.l.b16 %v2824
    %v2960 = vunpack.c.l.b16 %v2825
    %v2961 = vunpack.c.l.b16 %v2826
    %v2962 = vunpack.c.l.b16 %v2827
    %v2963 = vunpack.c.l.b16 %v2828
    %v2964 = vunpack.c.l.b16 %v2829
    %v2965 = vunpack.c.l.b16 %v2830
    %v2966 = vunpack.c.l.b16 %v2831
    %v2967 = vunpack.c.l.b16 %v2832
    %v2968 = vunpack.c.l.b16 %v2833
    %v2969 = vunpack.c.l.b16 %v2834
    %v2970 = vunpack.c.l.b16 %v2835
    %v2971 = vunpack.c.l.b16 %v2836
    %v2972 = vunpack.c.l.b16 %v2837
    %v2973 = vpack.c.b16 %v2910, %v2909
    %v2974 = vpack.c.b16 %v2912, %v2911
    %v2975 = vpack.c.b16 %v2914, %v2913
    %v2976 = vpack.c.b16 %v2916, %v2915
    %v2977 = vpack.c.b16 %v2918, %v2917
    %v2978 = vpack.c.b16 %v2920, %v2919
    %v2979 = vpack.c.b16 %v2922, %v2921
    %v2980 = vpack.c.b16 %v2924, %v2923
    %v2981 = vpack.c.b16 %v2926, %v2925
    %v2982 = vpack.c.b16 %v2928, %v2927
    %v2983 = vpack.c.b16 %v2930, %v2929
    %v2984 = vpack.c.b16 %v2932, %v2931
    %v2985 = vpack.c.b16 %v2934, %v2933
    %v2986 = vpack.c.b16 %v2936, %v2935
    %v2987 = vpack.c.b16 %v2938, %v2937
    %v2988 = vpack.c.b16 %v2940, %v2939
    %v2989 = vpack.c.b16 %v2942, %v2941
    %v2990 = vpack.c.b16 %v2944, %v2943
    %v2991 = vpack.c.b16 %v2946, %v2945
    %v2992 = vpack.c.b16 %v2948, %v2947
    %v2993 = vpack.c.b16 %v2950, %v2949
    %v2994 = vpack.c.b16 %v2952, %v2951
    %v2995 = vpack.c.b16 %v2954, %v2953
    %v2996 = vpack.c.b16 %v2956, %v2955
    %v2997 = vpack.c.b16 %v2958, %v2957
    %v2998 = vpack.c.b16 %v2960, %v2959
    %v2999 = vpack.c.b16 %v2962, %v2961
    %v3000 = vpack.c.b16 %v2964, %v2963
    %v3001 = vpack.c.b16 %v2966, %v2965
    %v3002 = vpack.c.b16 %v2968, %v2967
    %v3003 = vpack.c.b16 %v2970, %v2969
    %v3004 = vpack.c.b16 %v2972, %v2971
    %3037 = vmatprep.subr.bf16.mxu0 0
    %3038 = vmatpush1.bf16.msra.mxu0 %v2973
    %3039 = vmatprep.subr.bf16.mxu0 0
    %3040 = vmatpush1.bf16.msra.mxu0 %v2974
    %3041 = vmatprep.subr.bf16.mxu0 0
    %3042 = vmatpush1.bf16.msra.mxu0 %v2975
    %3043 = vmatprep.subr.bf16.mxu0 0
    %3044 = vmatpush1.bf16.msra.mxu0 %v2976
    %3045 = vmatprep.subr.bf16.mxu0 0
    %3046 = vmatpush1.bf16.msra.mxu0 %v2977
    %3047 = vmatprep.subr.bf16.mxu0 0
    %3048 = vmatpush1.bf16.msra.mxu0 %v2978
    %3049 = vmatprep.subr.bf16.mxu0 0
    %3050 = vmatpush1.bf16.msra.mxu0 %v2979
    %3051 = vmatprep.subr.bf16.mxu0 0
    %3052 = vmatpush1.bf16.msra.mxu0 %v2980
    %3053 = vmatprep.subr.bf16.mxu0 0
    %3054 = vmatpush1.bf16.msra.mxu0 %v2981
    %3055 = vmatprep.subr.bf16.mxu0 0
    %3056 = vmatpush1.bf16.msra.mxu0 %v2982
    %3057 = vmatprep.subr.bf16.mxu0 0
    %3058 = vmatpush1.bf16.msra.mxu0 %v2983
    %3059 = vmatprep.subr.bf16.mxu0 0
    %3060 = vmatpush1.bf16.msra.mxu0 %v2984
    %3061 = vmatprep.subr.bf16.mxu0 0
    %3062 = vmatpush1.bf16.msra.mxu0 %v2985
    %3063 = vmatprep.subr.bf16.mxu0 0
    %3064 = vmatpush1.bf16.msra.mxu0 %v2986
    %3065 = vmatprep.subr.bf16.mxu0 0
    %3066 = vmatpush1.bf16.msra.mxu0 %v2987
    %3067 = vmatprep.subr.bf16.mxu0 0
    %3068 = vmatpush1.bf16.msra.mxu0 %v2988
    %3069 = vmatprep.mubr.bf16.mxu0 %v2771
    %3070 = vmatmul.mubr.bf16.gmra.mrb[0].mxu0 %v2770
    %v3071 = vpop.f32.mrb[0].mxu0
    %v3072 = vadd.f32 %v2843, %v3071
    %v3073 = vpop.f32.mrb[0].mxu0
    %v3074 = vpop.f32.mrb[0].mxu0
    %v3075 = vpop.f32.mrb[0].mxu0
    %3076 = vdwg.mxu0
    %3077 = vmatprep.subr.bf16.mxu0 0
    %3078 = vmatpush1.bf16.msra.mxu0 %v2989
    %3079 = vmatprep.subr.bf16.mxu0 0
    %3080 = vmatpush1.bf16.msra.mxu0 %v2990
    %3081 = vmatprep.subr.bf16.mxu0 0
    %3082 = vmatpush1.bf16.msra.mxu0 %v2991
    %3083 = vmatprep.subr.bf16.mxu0 0
    %3084 = vmatpush1.bf16.msra.mxu0 %v2992
    %3085 = vmatprep.subr.bf16.mxu0 0
    %3086 = vmatpush1.bf16.msra.mxu0 %v2993
    %3087 = vmatprep.subr.bf16.mxu0 0
    %3088 = vmatpush1.bf16.msra.mxu0 %v2994
    %3089 = vmatprep.subr.bf16.mxu0 0
    %3090 = vmatpush1.bf16.msra.mxu0 %v2995
    %3091 = vmatprep.subr.bf16.mxu0 0
    %3092 = vmatpush1.bf16.msra.mxu0 %v2996
    %3093 = vmatprep.subr.bf16.mxu0 0
    %3094 = vmatpush1.bf16.msra.mxu0 %v2997
    %3095 = vmatprep.subr.bf16.mxu0 0
    %3096 = vmatpush1.bf16.msra.mxu0 %v2998
    %3097 = vmatprep.subr.bf16.mxu0 0
    %3098 = vmatpush1.bf16.msra.mxu0 %v2999
    %3099 = vmatprep.subr.bf16.mxu0 0
    %3100 = vmatpush1.bf16.msra.mxu0 %v3000
    %3101 = vmatprep.subr.bf16.mxu0 0
    %3102 = vmatpush1.bf16.msra.mxu0 %v3001
    %3103 = vmatprep.subr.bf16.mxu0 0
    %3104 = vmatpush1.bf16.msra.mxu0 %v3002
    %3105 = vmatprep.subr.bf16.mxu0 0
    %3106 = vmatpush1.bf16.msra.mxu0 %v3003
    %3107 = vmatprep.subr.bf16.mxu0 0
    %3108 = vmatpush1.bf16.msra.mxu0 %v3004
    %3109 = vmatprep.mubr.bf16.mxu0 %v2773
    %3110 = vmatmul.mubr.bf16.gmra.mrb[0].mxu0 %v2772
    %v3111 = vpop.f32.mrb[0].mxu0
    %v3112 = vadd.f32 %v3072, %v3111
    %v3113 = vpop.f32.mrb[0].mxu0
    %v3114 = vpop.f32.mrb[0].mxu0
    %v3115 = vpop.f32.mrb[0].mxu0
    %3116 = vdwg.mxu0
    %3117 = vst [vmem:[#allocation10] sm:$0xff] %v3112
    // Predicated region
    $region46: #{tpu_custom_call.1} parent=1 // pred_check
      _
    $region47: #{tpu_custom_call.1} parent=1 // pred_check_branch
      %3119 = sbr.rel (0) target = $region49
    $region48: #{tpu_custom_call.1} parent=1 // pred_region
      %s3121 = ssub.s32 128, 128
      %3122 = vsyncadd [#allocation4], %s3121
      %s3124 = sshll.u32 [#allocation10], 4
      %s3125 = int_to_ptr.vmem [resolvable:$true] %s3124
      %3127 = dma.vmem_to_hbm [thread:$0]  %s3125, 128, %s7, [#allocation4]
    $region49: #{tpu_custom_call.1} parent=1 // pred_fallthru
      _
    // Predicated region
    $region50: #{tpu_custom_call.1} parent=1 // pred_check
      _
    $region51: #{tpu_custom_call.1} parent=1 // pred_check_branch
      %3129 = sbr.rel (0) target = $region53
    $region52: #{tpu_custom_call.1} parent=1 // pred_region
      %3130 = dma.done [#allocation4], 128
    $region53: #{tpu_custom_call.1} parent=1 // pred_fallthru
      _
    %3131 = vsyncpa [#allocation3], 1
    %3132 = vsyncpa [#allocation6], 1
    %3133 = vsyncpa [#allocation9], 1
    %3134 = vsyncpa [#allocation4], 1

</llo_original>
